<compile_context>
chip_gen: v5e
topology: v5e:2x2
jax: 0.10.0
libtpu: 0.0.40
codegen_flags: <defaults>
</compile_context>

<pallas_src>
import jax
import jax.numpy as jnp
from jax import lax
from jax.experimental import pallas as pl
from jax.experimental.pallas import tpu as pltpu


# ---------------------------------------------------------------------------
# Fused kernel: 1x1 conv -> 3x3 conv + SiLU -> 3x3 conv, all in VMEM.
# Activations are (C, H*W): channels on sublanes, flattened spatial on lanes.
# ---------------------------------------------------------------------------
def make_vd_kernel(H, W, G, c_pq, c_hid, c_out):
    HW = H * W
    TAPS = [(dy, dx) for dy in (-1, 0, 1) for dx in (-1, 0, 1)]

    def kernel(z_ref, mask_ref, pqw_ref, pqb_ref, w1_ref, b1_ref,
               w2_ref, b2_ref, o_ref, buf1, buf2, p1, p2):
        # Column-validity masks for the dx = +/-1 taps, shape (1, HW).
        lmask = mask_ref[0:1, :]     # 0.0 where x == 0
        rmask = mask_ref[1:2, :]     # 0.0 where x == W-1

        # ---- post_quant_conv (1x1) inline: zpq = Wpq @ z + bpq -------------
        z = z_ref[0]                                               # (c_lat, HW)
        zpq = (jnp.dot(pqw_ref[...], z, preferred_element_type=jnp.float32)
               + pqb_ref[...])                                     # (c_pq, HW)

        def im2col(a, buf, patches, cin):
            # Build zero-padded 3x3 patches of a=(cin, HW) into (9*cin, HW).
            zero_guard = jnp.zeros((cin, G), jnp.float32)
            buf[:, 0:G] = zero_guard                  # left halo (y < 0)
            buf[:, G + HW:G + HW + G] = zero_guard    # right halo (y >= H)
            buf[:, G:G + HW] = a
            for t, (dy, dx) in enumerate(TAPS):
                s = dy * W + dx
                tap = buf[:, G + s:G + s + HW]        # shifted read; halo -> 0
                if dx == 1:
                    tap = tap * rmask                 # kill row-wrap at x==W-1
                elif dx == -1:
                    tap = tap * lmask                 # kill row-wrap at x==0
                patches[t * cin:(t + 1) * cin, :] = tap

        # ---- decoder.conv_in (3x3 SAME) + SiLU; intermediate stays in VMEM --
        im2col(zpq, buf1, p1, c_pq)
        h = (jnp.dot(w1_ref[...], p1[...], preferred_element_type=jnp.float32)
             + b1_ref[...])                                        # (c_hid, HW)
        h = h * jax.nn.sigmoid(h)                                  # SiLU, f32

        # ---- decoder.conv_out (3x3 SAME) ------------------------------------
        im2col(h, buf2, p2, c_hid)
        out = (jnp.dot(w2_ref[...], p2[...], preferred_element_type=jnp.float32)
               + b2_ref[...])                                      # (c_out, HW)
        o_ref[0] = out.astype(o_ref.dtype)                         # lane-dense store

    return kernel


# ---------------------------------------------------------------------------
# Wrapper: pack weights into matmul-ready layouts (tiny), call the kernel.
# ---------------------------------------------------------------------------
def vd_forward(z_nchw, params):
    N, c_lat, H, W = z_nchw.shape
    HW = H * W
    c_hid = params["w1"].shape[-1]
    c_out = params["w2"].shape[-1]
    c_pq = ((c_lat + 7) // 8) * 8            # pad pq output channels -> sublane multiple
    G = ((W + 1 + 127) // 128) * 128         # halo guard width (lane-aligned)

    # Weight packing (weights only — negligible; activations are untouched).
    pqw = jnp.pad(params["pq_w"].T, ((0, c_pq - c_lat), (0, 0)))        # (c_pq, c_lat)
    pqb = jnp.pad(params["pq_b"].T, ((0, c_pq - c_lat), (0, 0)))        # (c_pq, 1)
    w1p = jnp.pad(params["w1"], ((0, 0), (0, 0), (0, c_pq - c_lat), (0, 0)))
    w1m = jnp.transpose(w1p, (3, 0, 1, 2)).reshape(c_hid, 9 * c_pq)     # (c_hid, 9*c_pq)
    b1m = params["b1"].T                                                # (c_hid, 1)
    w2m = jnp.transpose(params["w2"], (3, 0, 1, 2)).reshape(c_out, 9 * c_hid)
    b2m = params["b2"].T                                                # (c_out, 1)

    xpos = jnp.arange(HW, dtype=jnp.int32) % W
    masks = jnp.stack([(xpos != 0), (xpos != W - 1)]).astype(jnp.float32)   # (2, HW)

    z3 = z_nchw.reshape(N, c_lat, HW)        # NCHW flattened — free, lane-dense

    kernel = make_vd_kernel(H, W, G, c_pq, c_hid, c_out)
    out = pl.pallas_call(
        kernel,
        out_shape=jax.ShapeDtypeStruct((N, c_out, HW), jnp.float32),
        grid=(N,),
        in_specs=[
            pl.BlockSpec((1, c_lat, HW), lambda n: (n, 0, 0)),
            pl.BlockSpec((2, HW), lambda n: (0, 0)),
            pl.BlockSpec((c_pq, c_lat), lambda n: (0, 0)),
            pl.BlockSpec((c_pq, 1), lambda n: (0, 0)),
            pl.BlockSpec((c_hid, 9 * c_pq), lambda n: (0, 0)),
            pl.BlockSpec((c_hid, 1), lambda n: (0, 0)),
            pl.BlockSpec((c_out, 9 * c_hid), lambda n: (0, 0)),
            pl.BlockSpec((c_out, 1), lambda n: (0, 0)),
        ],
        out_specs=pl.BlockSpec((1, c_out, HW), lambda n: (n, 0, 0)),
        scratch_shapes=[
            pltpu.VMEM((c_pq, HW + 2 * G), jnp.float32),      # halo buffer, conv_in
            pltpu.VMEM((c_hid, HW + 2 * G), jnp.float32),     # halo buffer, conv_out
            pltpu.VMEM((9 * c_pq, HW), jnp.float32),          # im2col patches, conv_in
            pltpu.VMEM((9 * c_hid, HW), jnp.float32),         # im2col patches, conv_out
        ],
        compiler_params=pltpu.CompilerParams(
            dimension_semantics=("parallel",)),               # N=2 -> 2 TCs on v7x
    )(z3, masks, pqw, pqb, w1m, b1m, w2m, b2m)

    return out.reshape(N, c_out, H, W)       # already NCHW; reshape is free


# ---------------------------------------------------------------------------
# Pure-JAX reference (same math, lax.conv) for a sanity check.
# ---------------------------------------------------------------------------
def vd_reference(z_nchw, params):
    z = jnp.transpose(z_nchw, (0, 2, 3, 1))
    h = jnp.einsum("nhwc,cd->nhwd", z, params["pq_w"],
                   precision=lax.Precision.HIGHEST) + params["pq_b"][0]
    h = lax.conv_general_dilated(
        h, params["w1"], (1, 1), "SAME",
        dimension_numbers=("NHWC", "HWIO", "NHWC"),
        precision=lax.Precision.HIGHEST) + params["b1"][0]
    h = h * jax.nn.sigmoid(h)
    h = lax.conv_general_dilated(
        h, params["w2"], (1, 1), "SAME",
        dimension_numbers=("NHWC", "HWIO", "NHWC"),
        precision=lax.Precision.HIGHEST) + params["b2"][0]
    return jnp.transpose(h, (0, 3, 1, 2))


def init_params(key, c_lat=4, c_hid=32, c_out=3):
    k_pq, k_w1, k_w2 = jax.random.split(key, 3)
    return {
        "pq_w": 0.2 * jax.random.normal(k_pq, (c_lat, c_lat), jnp.float32),
        "pq_b": 0.01 * jnp.ones((1, c_lat), jnp.float32),
        "w1": 0.1 * jax.random.normal(k_w1, (3, 3, c_lat, c_hid), jnp.float32),
        "b1": 0.01 * jnp.ones((1, c_hid), jnp.float32),
        "w2": 0.1 * jax.random.normal(k_w2, (3, 3, c_hid, c_out), jnp.float32),
        "b2": 0.01 * jnp.ones((1, c_out), jnp.float32),
    }


if __name__ == "__main__":
    N, C_LAT, H, W = 2, 4, 16, 16
    k_z, k_p = jax.random.split(jax.random.PRNGKey(0))
    params = init_params(k_p, c_lat=C_LAT, c_hid=32, c_out=3)
    z = jax.random.normal(k_z, (N, C_LAT, H, W), jnp.float32)

    out = jax.block_until_ready(jax.jit(vd_forward)(z, params))
    ref = jax.block_until_ready(vd_reference(z, params))

    assert out.shape == (N, 3, H, W), out.shape
    assert jnp.allclose(out, ref, atol=1e-4, rtol=1e-4), "mismatch vs reference"

    print("KERNEL_OK")
</pallas_src>

<mosaic_0001>
module attributes {stable_mosaic.version = 11 : i64} {
  func.func @kernel(%arg0: i32, %arg1: memref<1x4x256xf32, #tpu.memory_space<vmem>>, %arg2: memref<2x256xf32, #tpu.memory_space<vmem>>, %arg3: memref<8x4xf32, #tpu.memory_space<vmem>>, %arg4: memref<8x1xf32, #tpu.memory_space<vmem>>, %arg5: memref<32x72xf32, #tpu.memory_space<vmem>>, %arg6: memref<32x1xf32, #tpu.memory_space<vmem>>, %arg7: memref<3x288xf32, #tpu.memory_space<vmem>>, %arg8: memref<3x1xf32, #tpu.memory_space<vmem>>, %arg9: memref<1x3x256xf32, #tpu.memory_space<vmem>>, %arg10: memref<8x512xf32, #tpu.memory_space<vmem>>, %arg11: memref<32x512xf32, #tpu.memory_space<vmem>>, %arg12: memref<72x256xf32, #tpu.memory_space<vmem>>, %arg13: memref<288x256xf32, #tpu.memory_space<vmem>>) attributes {dimension_semantics = [#tpu.dimension_semantics<parallel>], iteration_bounds = array<i64: 2>, scalar_prefetch = 0 : i64, scratch_operands = 4 : i64, tpu.core_type = #tpu.core_type<tc>, window_params = [{transform_indices = @transform_0, window_bounds = array<i64: 1, 4, 256>}, {pipeline_mode = #tpu.pipeline_mode<synchronous>, transform_indices = @transform_1, window_bounds = array<i64: 2, 256>}, {pipeline_mode = #tpu.pipeline_mode<synchronous>, transform_indices = @transform_2, window_bounds = array<i64: 8, 4>}, {pipeline_mode = #tpu.pipeline_mode<synchronous>, transform_indices = @transform_3, window_bounds = array<i64: 8, 1>}, {pipeline_mode = #tpu.pipeline_mode<synchronous>, transform_indices = @transform_4, window_bounds = array<i64: 32, 72>}, {pipeline_mode = #tpu.pipeline_mode<synchronous>, transform_indices = @transform_5, window_bounds = array<i64: 32, 1>}, {pipeline_mode = #tpu.pipeline_mode<synchronous>, transform_indices = @transform_6, window_bounds = array<i64: 3, 288>}, {pipeline_mode = #tpu.pipeline_mode<synchronous>, transform_indices = @transform_7, window_bounds = array<i64: 3, 1>}, {transform_indices = @transform_8, window_bounds = array<i64: 1, 3, 256>}]} {
    %c0 = arith.constant 0 : index
    %c0_0 = arith.constant 0 : index
    %0 = vector.load %arg2[%c0, %c0_0] : memref<2x256xf32, #tpu.memory_space<vmem>>, vector<1x256xf32>
    %c1 = arith.constant 1 : index
    %c0_1 = arith.constant 0 : index
    %1 = vector.load %arg2[%c1, %c0_1] : memref<2x256xf32, #tpu.memory_space<vmem>>, vector<1x256xf32>
    %c0_2 = arith.constant 0 : index
    %c0_3 = arith.constant 0 : index
    %c0_4 = arith.constant 0 : index
    %2 = vector.load %arg1[%c0_2, %c0_3, %c0_4] : memref<1x4x256xf32, #tpu.memory_space<vmem>>, vector<1x4x256xf32>
    %3 = vector.shape_cast %2 : vector<1x4x256xf32> to vector<4x256xf32>
    %c0_5 = arith.constant 0 : index
    %c0_6 = arith.constant 0 : index
    %4 = vector.load %arg3[%c0_5, %c0_6] : memref<8x4xf32, #tpu.memory_space<vmem>>, vector<8x4xf32>
    %cst = arith.constant dense<0.000000e+00> : vector<8x256xf32>
    %5 = tpu.matmul %4, %3, %cst {dimension_numbers = #tpu.dot_dimension_numbers<[1], [0], [0], [1], [0, 0, 1, 1], [], []>} : vector<8x4xf32>, vector<4x256xf32>, vector<8x256xf32> -> vector<8x256xf32>
    %c0_7 = arith.constant 0 : index
    %c0_8 = arith.constant 0 : index
    %6 = vector.load %arg4[%c0_7, %c0_8] : memref<8x1xf32, #tpu.memory_space<vmem>>, vector<8x1xf32>
    %7 = vector.broadcast %6 : vector<8x1xf32> to vector<8x256xf32>
    %8 = arith.addf %5, %7 : vector<8x256xf32>
    %cst_9 = arith.constant 0.000000e+00 : f32
    %9 = vector.broadcast %cst_9 : f32 to vector<8x128xf32>
    %c0_10 = arith.constant 0 : index
    %c0_11 = arith.constant 0 : index
    %10 = vector.load %arg10[%c0_10, %c0_11] : memref<8x512xf32, #tpu.memory_space<vmem>>, vector<8x128xf32>
    tpu.vector_store %arg10[%c0_10, %c0_11], %9 {strides = array<i32>} : memref<8x512xf32, #tpu.memory_space<vmem>>, vector<8x128xf32>,
    %c0_12 = arith.constant 0 : index
    %c384 = arith.constant 384 : index
    %11 = vector.load %arg10[%c0_12, %c384] : memref<8x512xf32, #tpu.memory_space<vmem>>, vector<8x128xf32>
    tpu.vector_store %arg10[%c0_12, %c384], %9 {strides = array<i32>} : memref<8x512xf32, #tpu.memory_space<vmem>>, vector<8x128xf32>,
    %c0_13 = arith.constant 0 : index
    %c128 = arith.constant 128 : index
    %12 = vector.load %arg10[%c0_13, %c128] : memref<8x512xf32, #tpu.memory_space<vmem>>, vector<8x256xf32>
    tpu.vector_store %arg10[%c0_13, %c128], %8 {strides = array<i32>} : memref<8x512xf32, #tpu.memory_space<vmem>>, vector<8x256xf32>,
    %c0_14 = arith.constant 0 : index
    %c111 = arith.constant 111 : index
    %13 = vector.load %arg10[%c0_14, %c111] : memref<8x512xf32, #tpu.memory_space<vmem>>, vector<8x256xf32>
    %14 = vector.broadcast %0 : vector<1x256xf32> to vector<8x256xf32>
    %15 = arith.mulf %13, %14 : vector<8x256xf32>
    %c0_15 = arith.constant 0 : index
    %c0_16 = arith.constant 0 : index
    %16 = vector.load %arg12[%c0_15, %c0_16] : memref<72x256xf32, #tpu.memory_space<vmem>>, vector<8x256xf32>
    tpu.vector_store %arg12[%c0_15, %c0_16], %15 {strides = array<i32>} : memref<72x256xf32, #tpu.memory_space<vmem>>, vector<8x256xf32>,
    %c0_17 = arith.constant 0 : index
    %c112 = arith.constant 112 : index
    %17 = vector.load %arg10[%c0_17, %c112] : memref<8x512xf32, #tpu.memory_space<vmem>>, vector<8x256xf32>
    %c8 = arith.constant 8 : index
    %c0_18 = arith.constant 0 : index
    %18 = vector.load %arg12[%c8, %c0_18] : memref<72x256xf32, #tpu.memory_space<vmem>>, vector<8x256xf32>
    tpu.vector_store %arg12[%c8, %c0_18], %17 {strides = array<i32>} : memref<72x256xf32, #tpu.memory_space<vmem>>, vector<8x256xf32>,
    %c0_19 = arith.constant 0 : index
    %c113 = arith.constant 113 : index
    %19 = vector.load %arg10[%c0_19, %c113] : memref<8x512xf32, #tpu.memory_space<vmem>>, vector<8x256xf32>
    %20 = vector.broadcast %1 : vector<1x256xf32> to vector<8x256xf32>
    %21 = arith.mulf %19, %20 : vector<8x256xf32>
    %c16 = arith.constant 16 : index
    %c0_20 = arith.constant 0 : index
    %22 = vector.load %arg12[%c16, %c0_20] : memref<72x256xf32, #tpu.memory_space<vmem>>, vector<8x256xf32>
    tpu.vector_store %arg12[%c16, %c0_20], %21 {strides = array<i32>} : memref<72x256xf32, #tpu.memory_space<vmem>>, vector<8x256xf32>,
    %c0_21 = arith.constant 0 : index
    %c127 = arith.constant 127 : index
    %23 = vector.load %arg10[%c0_21, %c127] : memref<8x512xf32, #tpu.memory_space<vmem>>, vector<8x256xf32>
    %24 = vector.broadcast %0 : vector<1x256xf32> to vector<8x256xf32>
    %25 = arith.mulf %23, %24 : vector<8x256xf32>
    %c24 = arith.constant 24 : index
    %c0_22 = arith.constant 0 : index
    %26 = vector.load %arg12[%c24, %c0_22] : memref<72x256xf32, #tpu.memory_space<vmem>>, vector<8x256xf32>
    tpu.vector_store %arg12[%c24, %c0_22], %25 {strides = array<i32>} : memref<72x256xf32, #tpu.memory_space<vmem>>, vector<8x256xf32>,
    %c0_23 = arith.constant 0 : index
    %c128_24 = arith.constant 128 : index
    %27 = vector.load %arg10[%c0_23, %c128_24] : memref<8x512xf32, #tpu.memory_space<vmem>>, vector<8x256xf32>
    %c32 = arith.constant 32 : index
    %c0_25 = arith.constant 0 : index
    %28 = vector.load %arg12[%c32, %c0_25] : memref<72x256xf32, #tpu.memory_space<vmem>>, vector<8x256xf32>
    tpu.vector_store %arg12[%c32, %c0_25], %27 {strides = array<i32>} : memref<72x256xf32, #tpu.memory_space<vmem>>, vector<8x256xf32>,
    %c0_26 = arith.constant 0 : index
    %c129 = arith.constant 129 : index
    %29 = vector.load %arg10[%c0_26, %c129] : memref<8x512xf32, #tpu.memory_space<vmem>>, vector<8x256xf32>
    %30 = vector.broadcast %1 : vector<1x256xf32> to vector<8x256xf32>
    %31 = arith.mulf %29, %30 : vector<8x256xf32>
    %c40 = arith.constant 40 : index
    %c0_27 = arith.constant 0 : index
    %32 = vector.load %arg12[%c40, %c0_27] : memref<72x256xf32, #tpu.memory_space<vmem>>, vector<8x256xf32>
    tpu.vector_store %arg12[%c40, %c0_27], %31 {strides = array<i32>} : memref<72x256xf32, #tpu.memory_space<vmem>>, vector<8x256xf32>,
    %c0_28 = arith.constant 0 : index
    %c143 = arith.constant 143 : index
    %33 = vector.load %arg10[%c0_28, %c143] : memref<8x512xf32, #tpu.memory_space<vmem>>, vector<8x256xf32>
    %34 = vector.broadcast %0 : vector<1x256xf32> to vector<8x256xf32>
    %35 = arith.mulf %33, %34 : vector<8x256xf32>
    %c48 = arith.constant 48 : index
    %c0_29 = arith.constant 0 : index
    %36 = vector.load %arg12[%c48, %c0_29] : memref<72x256xf32, #tpu.memory_space<vmem>>, vector<8x256xf32>
    tpu.vector_store %arg12[%c48, %c0_29], %35 {strides = array<i32>} : memref<72x256xf32, #tpu.memory_space<vmem>>, vector<8x256xf32>,
    %c0_30 = arith.constant 0 : index
    %c144 = arith.constant 144 : index
    %37 = vector.load %arg10[%c0_30, %c144] : memref<8x512xf32, #tpu.memory_space<vmem>>, vector<8x256xf32>
    %c56 = arith.constant 56 : index
    %c0_31 = arith.constant 0 : index
    %38 = vector.load %arg12[%c56, %c0_31] : memref<72x256xf32, #tpu.memory_space<vmem>>, vector<8x256xf32>
    tpu.vector_store %arg12[%c56, %c0_31], %37 {strides = array<i32>} : memref<72x256xf32, #tpu.memory_space<vmem>>, vector<8x256xf32>,
    %c0_32 = arith.constant 0 : index
    %c145 = arith.constant 145 : index
    %39 = vector.load %arg10[%c0_32, %c145] : memref<8x512xf32, #tpu.memory_space<vmem>>, vector<8x256xf32>
    %40 = vector.broadcast %1 : vector<1x256xf32> to vector<8x256xf32>
    %41 = arith.mulf %39, %40 : vector<8x256xf32>
    %c64 = arith.constant 64 : index
    %c0_33 = arith.constant 0 : index
    %42 = vector.load %arg12[%c64, %c0_33] : memref<72x256xf32, #tpu.memory_space<vmem>>, vector<8x256xf32>
    tpu.vector_store %arg12[%c64, %c0_33], %41 {strides = array<i32>} : memref<72x256xf32, #tpu.memory_space<vmem>>, vector<8x256xf32>,
    %c0_34 = arith.constant 0 : index
    %c0_35 = arith.constant 0 : index
    %43 = vector.load %arg5[%c0_34, %c0_35] : memref<32x72xf32, #tpu.memory_space<vmem>>, vector<32x72xf32>
    %c0_36 = arith.constant 0 : index
    %c0_37 = arith.constant 0 : index
    %44 = vector.load %arg12[%c0_36, %c0_37] : memref<72x256xf32, #tpu.memory_space<vmem>>, vector<72x256xf32>
    %cst_38 = arith.constant dense<0.000000e+00> : vector<32x256xf32>
    %45 = tpu.matmul %43, %44, %cst_38 {dimension_numbers = #tpu.dot_dimension_numbers<[1], [0], [0], [1], [0, 0, 1, 1], [], []>} : vector<32x72xf32>, vector<72x256xf32>, vector<32x256xf32> -> vector<32x256xf32>
    %c0_39 = arith.constant 0 : index
    %c0_40 = arith.constant 0 : index
    %46 = vector.load %arg6[%c0_39, %c0_40] : memref<32x1xf32, #tpu.memory_space<vmem>>, vector<32x1xf32>
    %47 = vector.broadcast %46 : vector<32x1xf32> to vector<32x256xf32>
    %48 = arith.addf %45, %47 : vector<32x256xf32>
    %49 = arith.negf %48 : vector<32x256xf32>
    %50 = math.exp %49 : vector<32x256xf32>
    %cst_41 = arith.constant 1.000000e+00 : f32
    %51 = vector.broadcast %cst_41 : f32 to vector<32x256xf32>
    %52 = arith.addf %51, %50 : vector<32x256xf32>
    %53 = arith.divf %51, %52 : vector<32x256xf32>
    %54 = arith.mulf %48, %53 : vector<32x256xf32>
    %cst_42 = arith.constant 0.000000e+00 : f32
    %55 = vector.broadcast %cst_42 : f32 to vector<32x128xf32>
    %c0_43 = arith.constant 0 : index
    %c0_44 = arith.constant 0 : index
    %56 = vector.load %arg11[%c0_43, %c0_44] : memref<32x512xf32, #tpu.memory_space<vmem>>, vector<32x128xf32>
    tpu.vector_store %arg11[%c0_43, %c0_44], %55 {strides = array<i32>} : memref<32x512xf32, #tpu.memory_space<vmem>>, vector<32x128xf32>,
    %c0_45 = arith.constant 0 : index
    %c384_46 = arith.constant 384 : index
    %57 = vector.load %arg11[%c0_45, %c384_46] : memref<32x512xf32, #tpu.memory_space<vmem>>, vector<32x128xf32>
    tpu.vector_store %arg11[%c0_45, %c384_46], %55 {strides = array<i32>} : memref<32x512xf32, #tpu.memory_space<vmem>>, vector<32x128xf32>,
    %c0_47 = arith.constant 0 : index
    %c128_48 = arith.constant 128 : index
    %58 = vector.load %arg11[%c0_47, %c128_48] : memref<32x512xf32, #tpu.memory_space<vmem>>, vector<32x256xf32>
    tpu.vector_store %arg11[%c0_47, %c128_48], %54 {strides = array<i32>} : memref<32x512xf32, #tpu.memory_space<vmem>>, vector<32x256xf32>,
    %c0_49 = arith.constant 0 : index
    %c111_50 = arith.constant 111 : index
    %59 = vector.load %arg11[%c0_49, %c111_50] : memref<32x512xf32, #tpu.memory_space<vmem>>, vector<32x256xf32>
    %60 = vector.broadcast %0 : vector<1x256xf32> to vector<32x256xf32>
    %61 = arith.mulf %59, %60 : vector<32x256xf32>
    %c0_51 = arith.constant 0 : index
    %c0_52 = arith.constant 0 : index
    %62 = vector.load %arg13[%c0_51, %c0_52] : memref<288x256xf32, #tpu.memory_space<vmem>>, vector<32x256xf32>
    tpu.vector_store %arg13[%c0_51, %c0_52], %61 {strides = array<i32>} : memref<288x256xf32, #tpu.memory_space<vmem>>, vector<32x256xf32>,
    %c0_53 = arith.constant 0 : index
    %c112_54 = arith.constant 112 : index
    %63 = vector.load %arg11[%c0_53, %c112_54] : memref<32x512xf32, #tpu.memory_space<vmem>>, vector<32x256xf32>
    %c32_55 = arith.constant 32 : index
    %c0_56 = arith.constant 0 : index
    %64 = vector.load %arg13[%c32_55, %c0_56] : memref<288x256xf32, #tpu.memory_space<vmem>>, vector<32x256xf32>
    tpu.vector_store %arg13[%c32_55, %c0_56], %63 {strides = array<i32>} : memref<288x256xf32, #tpu.memory_space<vmem>>, vector<32x256xf32>,
    %c0_57 = arith.constant 0 : index
    %c113_58 = arith.constant 113 : index
    %65 = vector.load %arg11[%c0_57, %c113_58] : memref<32x512xf32, #tpu.memory_space<vmem>>, vector<32x256xf32>
    %66 = vector.broadcast %1 : vector<1x256xf32> to vector<32x256xf32>
    %67 = arith.mulf %65, %66 : vector<32x256xf32>
    %c64_59 = arith.constant 64 : index
    %c0_60 = arith.constant 0 : index
    %68 = vector.load %arg13[%c64_59, %c0_60] : memref<288x256xf32, #tpu.memory_space<vmem>>, vector<32x256xf32>
    tpu.vector_store %arg13[%c64_59, %c0_60], %67 {strides = array<i32>} : memref<288x256xf32, #tpu.memory_space<vmem>>, vector<32x256xf32>,
    %c0_61 = arith.constant 0 : index
    %c127_62 = arith.constant 127 : index
    %69 = vector.load %arg11[%c0_61, %c127_62] : memref<32x512xf32, #tpu.memory_space<vmem>>, vector<32x256xf32>
    %70 = vector.broadcast %0 : vector<1x256xf32> to vector<32x256xf32>
    %71 = arith.mulf %69, %70 : vector<32x256xf32>
    %c96 = arith.constant 96 : index
    %c0_63 = arith.constant 0 : index
    %72 = vector.load %arg13[%c96, %c0_63] : memref<288x256xf32, #tpu.memory_space<vmem>>, vector<32x256xf32>
    tpu.vector_store %arg13[%c96, %c0_63], %71 {strides = array<i32>} : memref<288x256xf32, #tpu.memory_space<vmem>>, vector<32x256xf32>,
    %c0_64 = arith.constant 0 : index
    %c128_65 = arith.constant 128 : index
    %73 = vector.load %arg11[%c0_64, %c128_65] : memref<32x512xf32, #tpu.memory_space<vmem>>, vector<32x256xf32>
    %c128_66 = arith.constant 128 : index
    %c0_67 = arith.constant 0 : index
    %74 = vector.load %arg13[%c128_66, %c0_67] : memref<288x256xf32, #tpu.memory_space<vmem>>, vector<32x256xf32>
    tpu.vector_store %arg13[%c128_66, %c0_67], %73 {strides = array<i32>} : memref<288x256xf32, #tpu.memory_space<vmem>>, vector<32x256xf32>,
    %c0_68 = arith.constant 0 : index
    %c129_69 = arith.constant 129 : index
    %75 = vector.load %arg11[%c0_68, %c129_69] : memref<32x512xf32, #tpu.memory_space<vmem>>, vector<32x256xf32>
    %76 = vector.broadcast %1 : vector<1x256xf32> to vector<32x256xf32>
    %77 = arith.mulf %75, %76 : vector<32x256xf32>
    %c160 = arith.constant 160 : index
    %c0_70 = arith.constant 0 : index
    %78 = vector.load %arg13[%c160, %c0_70] : memref<288x256xf32, #tpu.memory_space<vmem>>, vector<32x256xf32>
    tpu.vector_store %arg13[%c160, %c0_70], %77 {strides = array<i32>} : memref<288x256xf32, #tpu.memory_space<vmem>>, vector<32x256xf32>,
    %c0_71 = arith.constant 0 : index
    %c143_72 = arith.constant 143 : index
    %79 = vector.load %arg11[%c0_71, %c143_72] : memref<32x512xf32, #tpu.memory_space<vmem>>, vector<32x256xf32>
    %80 = vector.broadcast %0 : vector<1x256xf32> to vector<32x256xf32>
    %81 = arith.mulf %79, %80 : vector<32x256xf32>
    %c192 = arith.constant 192 : index
    %c0_73 = arith.constant 0 : index
    %82 = vector.load %arg13[%c192, %c0_73] : memref<288x256xf32, #tpu.memory_space<vmem>>, vector<32x256xf32>
    tpu.vector_store %arg13[%c192, %c0_73], %81 {strides = array<i32>} : memref<288x256xf32, #tpu.memory_space<vmem>>, vector<32x256xf32>,
    %c0_74 = arith.constant 0 : index
    %c144_75 = arith.constant 144 : index
    %83 = vector.load %arg11[%c0_74, %c144_75] : memref<32x512xf32, #tpu.memory_space<vmem>>, vector<32x256xf32>
    %c224 = arith.constant 224 : index
    %c0_76 = arith.constant 0 : index
    %84 = vector.load %arg13[%c224, %c0_76] : memref<288x256xf32, #tpu.memory_space<vmem>>, vector<32x256xf32>
    tpu.vector_store %arg13[%c224, %c0_76], %83 {strides = array<i32>} : memref<288x256xf32, #tpu.memory_space<vmem>>, vector<32x256xf32>,
    %c0_77 = arith.constant 0 : index
    %c145_78 = arith.constant 145 : index
    %85 = vector.load %arg11[%c0_77, %c145_78] : memref<32x512xf32, #tpu.memory_space<vmem>>, vector<32x256xf32>
    %86 = vector.broadcast %1 : vector<1x256xf32> to vector<32x256xf32>
    %87 = arith.mulf %85, %86 : vector<32x256xf32>
    %c256 = arith.constant 256 : index
    %c0_79 = arith.constant 0 : index
    %88 = vector.load %arg13[%c256, %c0_79] : memref<288x256xf32, #tpu.memory_space<vmem>>, vector<32x256xf32>
    tpu.vector_store %arg13[%c256, %c0_79], %87 {strides = array<i32>} : memref<288x256xf32, #tpu.memory_space<vmem>>, vector<32x256xf32>,
    %c0_80 = arith.constant 0 : index
    %c0_81 = arith.constant 0 : index
    %89 = vector.load %arg7[%c0_80, %c0_81] : memref<3x288xf32, #tpu.memory_space<vmem>>, vector<3x288xf32>
    %c0_82 = arith.constant 0 : index
    %c0_83 = arith.constant 0 : index
    %90 = vector.load %arg13[%c0_82, %c0_83] : memref<288x256xf32, #tpu.memory_space<vmem>>, vector<288x256xf32>
    %cst_84 = arith.constant dense<0.000000e+00> : vector<3x256xf32>
    %91 = tpu.matmul %89, %90, %cst_84 {dimension_numbers = #tpu.dot_dimension_numbers<[1], [0], [0], [1], [0, 0, 1, 1], [], []>} : vector<3x288xf32>, vector<288x256xf32>, vector<3x256xf32> -> vector<3x256xf32>
    %c0_85 = arith.constant 0 : index
    %c0_86 = arith.constant 0 : index
    %92 = vector.load %arg8[%c0_85, %c0_86] : memref<3x1xf32, #tpu.memory_space<vmem>>, vector<3x1xf32>
    %93 = vector.broadcast %92 : vector<3x1xf32> to vector<3x256xf32>
    %94 = arith.addf %91, %93 : vector<3x256xf32>
    %c0_87 = arith.constant 0 : index
    %c0_88 = arith.constant 0 : index
    %c0_89 = arith.constant 0 : index
    %95 = vector.load %arg9[%c0_87, %c0_88, %c0_89] : memref<1x3x256xf32, #tpu.memory_space<vmem>>, vector<1x3x256xf32>
    %96 = vector.shape_cast %95 : vector<1x3x256xf32> to vector<3x256xf32>
    %97 = vector.shape_cast %94 : vector<3x256xf32> to vector<1x3x256xf32>
    tpu.vector_store %arg9[%c0_87, %c0_88, %c0_89], %97 {strides = array<i32>} : memref<1x3x256xf32, #tpu.memory_space<vmem>>, vector<1x3x256xf32>,
    return
  }
  func.func @transform_0(%arg0: i32) -> (i32, i32, i32) {
    %c0_i32 = arith.constant 0 : i32
    %c0_i32_0 = arith.constant 0 : i32
    %c0_i32_1 = arith.constant 0 : i32
    return %arg0, %c0_i32, %c0_i32_0 : i32, i32, i32
  }
  func.func @transform_1(%arg0: i32) -> (i32, i32) {
    %c0_i32 = arith.constant 0 : i32
    %c0_i32_0 = arith.constant 0 : i32
    %c0_i32_1 = arith.constant 0 : i32
    return %c0_i32, %c0_i32_0 : i32, i32
  }
  func.func @transform_2(%arg0: i32) -> (i32, i32) {
    %c0_i32 = arith.constant 0 : i32
    %c0_i32_0 = arith.constant 0 : i32
    %c0_i32_1 = arith.constant 0 : i32
    return %c0_i32, %c0_i32_0 : i32, i32
  }
  func.func @transform_3(%arg0: i32) -> (i32, i32) {
    %c0_i32 = arith.constant 0 : i32
    %c0_i32_0 = arith.constant 0 : i32
    %c0_i32_1 = arith.constant 0 : i32
    return %c0_i32, %c0_i32_0 : i32, i32
  }
  func.func @transform_4(%arg0: i32) -> (i32, i32) {
    %c0_i32 = arith.constant 0 : i32
    %c0_i32_0 = arith.constant 0 : i32
    %c0_i32_1 = arith.constant 0 : i32
    return %c0_i32, %c0_i32_0 : i32, i32
  }
  func.func @transform_5(%arg0: i32) -> (i32, i32) {
    %c0_i32 = arith.constant 0 : i32
    %c0_i32_0 = arith.constant 0 : i32
    %c0_i32_1 = arith.constant 0 : i32
    return %c0_i32, %c0_i32_0 : i32, i32
  }
  func.func @transform_6(%arg0: i32) -> (i32, i32) {
    %c0_i32 = arith.constant 0 : i32
    %c0_i32_0 = arith.constant 0 : i32
    %c0_i32_1 = arith.constant 0 : i32
    return %c0_i32, %c0_i32_0 : i32, i32
  }
  func.func @transform_7(%arg0: i32) -> (i32, i32) {
    %c0_i32 = arith.constant 0 : i32
    %c0_i32_0 = arith.constant 0 : i32
    %c0_i32_1 = arith.constant 0 : i32
    return %c0_i32, %c0_i32_0 : i32, i32
  }
  func.func @transform_8(%arg0: i32) -> (i32, i32, i32) {
    %c0_i32 = arith.constant 0 : i32
    %c0_i32_0 = arith.constant 0 : i32
    %c0_i32_1 = arith.constant 0 : i32
    return %arg0, %c0_i32, %c0_i32_0 : i32, i32, i32
  }
}

</mosaic_0001>

<llo_original>
// kernel: vd_forward.1
$region0: #{vd_forward.1}
  #allocation0 [shape = 'u32[]', space=smem, size = 0x4, offset = 0x4, fixed_abs, tag = 'smem constant byte address 0x4 - core index']
  #allocation1 [shape = 'u32[72,128]{1,0:T(1,128)}', space=vmem, size = 0x9000, scoped, tag = 'internal scratch']
  #allocation2 [shape = 'f32[8,512]{1,0:T(8,128)}', space=vmem, size = 0x4000, scoped, tag = 'scratch operand']
  #allocation3 [shape = 'f32[32,512]{1,0:T(8,128)}', space=vmem, size = 0x10000, scoped, tag = 'scratch operand']
  #allocation4 [shape = 'f32[72,256]{1,0:T(8,128)}', space=vmem, size = 0x12000, scoped, tag = 'scratch operand']
  #allocation5 [shape = 'f32[288,256]{1,0:T(8,128)}', space=vmem, size = 0x48000, scoped, tag = 'scratch operand']
  %s0 = inlined_call_operand.vmem [shape: f32[2,4,256], index: 0, kind: input, shape index: {}]
  %s1 = inlined_call_operand.vmem [shape: f32[2,256], index: 1, kind: input, shape index: {}]
  %s2 = inlined_call_operand.vmem [shape: f32[8,4], index: 2, kind: input, shape index: {}]
  %s3 = inlined_call_operand.vmem [shape: f32[8,1], index: 3, kind: input, shape index: {}]
  %s4 = inlined_call_operand.vmem [shape: f32[32,72], index: 4, kind: input, shape index: {}]
  %s5 = inlined_call_operand.vmem [shape: f32[32,1], index: 5, kind: input, shape index: {}]
  %s6 = inlined_call_operand.vmem [shape: f32[3,288], index: 6, kind: input, shape index: {}]
  %s7 = inlined_call_operand.vmem [shape: f32[3,1], index: 7, kind: input, shape index: {}]
  %s8 = inlined_call_operand.vmem [shape: f32[2,3,256], index: 8, kind: output, shape index: {}]
  %s9 = sld [smem:[#allocation0]]
  $region65: #{vd_forward.1} parent=0
    _
  %s11 = ssub.s32 1, %s9
  %s12 = scalar_select 0, %s11, %s9
  loop: start=0, step=1, limit=4
  $region2: #{vd_forward.1} parent=0 // loop_pre_header
    _
  $region3: #{vd_forward.1} parent=0 // loop_header
    %s14 = sphi 0, %s18
    %p15 = scmp.ge.s32.totalorder %s14, 4
    %s24 = sphi 0, %s26
    %s27 = sphi 0, %s24
    %s28 = sphi 0, %s27
    %s44 = sphi 0, %s28
    %s48 = sphi 0, %s48
    %s50 = sphi 0, %s48
    %s51 = sphi 0, %s50
    %s65 = sphi 0, %s51
    %s69 = sphi 0, %s69
    %s71 = sphi 0, %s69
    %s72 = sphi 0, %s71
    %s86 = sphi 0, %s72
    %s90 = sphi 0, %s90
    %s92 = sphi 0, %s90
    %s93 = sphi 0, %s92
    %s107 = sphi 0, %s93
    %s111 = sphi 0, %s111
    %s113 = sphi 0, %s111
    %s114 = sphi 0, %s113
    %s128 = sphi 0, %s114
    %s132 = sphi 0, %s132
    %s134 = sphi 0, %s132
    %s135 = sphi 0, %s134
    %s149 = sphi 0, %s135
    %s153 = sphi 0, %s153
    %s155 = sphi 0, %s153
    %s156 = sphi 0, %s155
    %s170 = sphi 0, %s156
    %s174 = sphi 0, %s174
    %s176 = sphi 0, %s174
    %s177 = sphi 0, %s176
    %s191 = sphi 0, %s177
    %s197 = sphi 0, %s199
    %s200 = sphi 0, %s197
    %s201 = sphi 0, %s200
    %s217 = sphi 0, %s201
  $region4: #{vd_forward.1} parent=0 // loop_header_branch
    %17 = sbr.rel (%p15) target = $region8
  $region5: #{vd_forward.1} parent=0 // loop_body
    %s19 = ssub.s32 %s14, 1
    %s20 = ssub.s32 %s14, 2
    %s21 = sadd.s32 %s14, 1
    %s22 = ssub.s32 %s14, %s21
    %p23 = scmp.eq.s32.totalorder %s22, 0
    %s25 = sadd.s32 %s24, 1
    %s26 = scalar_select %p23, %s24, %s25
    %p29 = pneg %p23
    %p30 = scmp.eq.s32.totalorder %s14, 1
    %p31 = por %p29, %p30
    %p32 = scmp.ne.s32.totalorder %s24, %s27
    %p33 = scmp.eq.s32.totalorder %s14, 0
    %p34 = por %p32, %p33
    %p35 = scmp.ne.s32.totalorder %s24, %s27
    %p36 = scmp.eq.s32.totalorder %s19, 1
    %p37 = por %p35, %p36
    %p38 = scmp.ne.s32.totalorder %s27, %s28
    %p39 = scmp.eq.s32.totalorder %s19, 0
    %p40 = por %p38, %p39
    %p41 = scmp.ne.s32.totalorder %s27, %s28
    %p42 = scmp.eq.s32.totalorder %s20, 1
    %p43 = por %p41, %p42
    %p45 = scmp.ne.s32.totalorder %s28, %s44
    %p46 = scmp.eq.s32.totalorder %s20, 0
    %p47 = por %p45, %p46
    %s49 = sadd.s32 %s48, 1
    %p52 = scmp.eq.s32.totalorder %s14, 1
    %p53 = scmp.ne.s32.totalorder %s48, %s50
    %p54 = scmp.eq.s32.totalorder %s14, 0
    %p55 = por %p53, %p54
    %p56 = scmp.ne.s32.totalorder %s48, %s50
    %p57 = scmp.eq.s32.totalorder %s19, 1
    %p58 = por %p56, %p57
    %p59 = scmp.ne.s32.totalorder %s50, %s51
    %p60 = scmp.eq.s32.totalorder %s19, 0
    %p61 = por %p59, %p60
    %p62 = scmp.ne.s32.totalorder %s50, %s51
    %p63 = scmp.eq.s32.totalorder %s20, 1
    %p64 = por %p62, %p63
    %p66 = scmp.ne.s32.totalorder %s51, %s65
    %p67 = scmp.eq.s32.totalorder %s20, 0
    %p68 = por %p66, %p67
    %s70 = sadd.s32 %s69, 1
    %p73 = scmp.eq.s32.totalorder %s14, 1
    %p74 = scmp.ne.s32.totalorder %s69, %s71
    %p75 = scmp.eq.s32.totalorder %s14, 0
    %p76 = por %p74, %p75
    %p77 = scmp.ne.s32.totalorder %s69, %s71
    %p78 = scmp.eq.s32.totalorder %s19, 1
    %p79 = por %p77, %p78
    %p80 = scmp.ne.s32.totalorder %s71, %s72
    %p81 = scmp.eq.s32.totalorder %s19, 0
    %p82 = por %p80, %p81
    %p83 = scmp.ne.s32.totalorder %s71, %s72
    %p84 = scmp.eq.s32.totalorder %s20, 1
    %p85 = por %p83, %p84
    %p87 = scmp.ne.s32.totalorder %s72, %s86
    %p88 = scmp.eq.s32.totalorder %s20, 0
    %p89 = por %p87, %p88
    %s91 = sadd.s32 %s90, 1
    %p94 = scmp.eq.s32.totalorder %s14, 1
    %p95 = scmp.ne.s32.totalorder %s90, %s92
    %p96 = scmp.eq.s32.totalorder %s14, 0
    %p97 = por %p95, %p96
    %p98 = scmp.ne.s32.totalorder %s90, %s92
    %p99 = scmp.eq.s32.totalorder %s19, 1
    %p100 = por %p98, %p99
    %p101 = scmp.ne.s32.totalorder %s92, %s93
    %p102 = scmp.eq.s32.totalorder %s19, 0
    %p103 = por %p101, %p102
    %p104 = scmp.ne.s32.totalorder %s92, %s93
    %p105 = scmp.eq.s32.totalorder %s20, 1
    %p106 = por %p104, %p105
    %p108 = scmp.ne.s32.totalorder %s93, %s107
    %p109 = scmp.eq.s32.totalorder %s20, 0
    %p110 = por %p108, %p109
    %s112 = sadd.s32 %s111, 1
    %p115 = scmp.eq.s32.totalorder %s14, 1
    %p116 = scmp.ne.s32.totalorder %s111, %s113
    %p117 = scmp.eq.s32.totalorder %s14, 0
    %p118 = por %p116, %p117
    %p119 = scmp.ne.s32.totalorder %s111, %s113
    %p120 = scmp.eq.s32.totalorder %s19, 1
    %p121 = por %p119, %p120
    %p122 = scmp.ne.s32.totalorder %s113, %s114
    %p123 = scmp.eq.s32.totalorder %s19, 0
    %p124 = por %p122, %p123
    %p125 = scmp.ne.s32.totalorder %s113, %s114
    %p126 = scmp.eq.s32.totalorder %s20, 1
    %p127 = por %p125, %p126
    %p129 = scmp.ne.s32.totalorder %s114, %s128
    %p130 = scmp.eq.s32.totalorder %s20, 0
    %p131 = por %p129, %p130
    %s133 = sadd.s32 %s132, 1
    %p136 = scmp.eq.s32.totalorder %s14, 1
    %p137 = scmp.ne.s32.totalorder %s132, %s134
    %p138 = scmp.eq.s32.totalorder %s14, 0
    %p139 = por %p137, %p138
    %p140 = scmp.ne.s32.totalorder %s132, %s134
    %p141 = scmp.eq.s32.totalorder %s19, 1
    %p142 = por %p140, %p141
    %p143 = scmp.ne.s32.totalorder %s134, %s135
    %p144 = scmp.eq.s32.totalorder %s19, 0
    %p145 = por %p143, %p144
    %p146 = scmp.ne.s32.totalorder %s134, %s135
    %p147 = scmp.eq.s32.totalorder %s20, 1
    %p148 = por %p146, %p147
    %p150 = scmp.ne.s32.totalorder %s135, %s149
    %p151 = scmp.eq.s32.totalorder %s20, 0
    %p152 = por %p150, %p151
    %s154 = sadd.s32 %s153, 1
    %p157 = scmp.eq.s32.totalorder %s14, 1
    %p158 = scmp.ne.s32.totalorder %s153, %s155
    %p159 = scmp.eq.s32.totalorder %s14, 0
    %p160 = por %p158, %p159
    %p161 = scmp.ne.s32.totalorder %s153, %s155
    %p162 = scmp.eq.s32.totalorder %s19, 1
    %p163 = por %p161, %p162
    %p164 = scmp.ne.s32.totalorder %s155, %s156
    %p165 = scmp.eq.s32.totalorder %s19, 0
    %p166 = por %p164, %p165
    %p167 = scmp.ne.s32.totalorder %s155, %s156
    %p168 = scmp.eq.s32.totalorder %s20, 1
    %p169 = por %p167, %p168
    %p171 = scmp.ne.s32.totalorder %s156, %s170
    %p172 = scmp.eq.s32.totalorder %s20, 0
    %p173 = por %p171, %p172
    %s175 = sadd.s32 %s174, 1
    %p178 = scmp.eq.s32.totalorder %s14, 1
    %p179 = scmp.ne.s32.totalorder %s174, %s176
    %p180 = scmp.eq.s32.totalorder %s14, 0
    %p181 = por %p179, %p180
    %p182 = scmp.ne.s32.totalorder %s174, %s176
    %p183 = scmp.eq.s32.totalorder %s19, 1
    %p184 = por %p182, %p183
    %p185 = scmp.ne.s32.totalorder %s176, %s177
    %p186 = scmp.eq.s32.totalorder %s19, 0
    %p187 = por %p185, %p186
    %p188 = scmp.ne.s32.totalorder %s176, %s177
    %p189 = scmp.eq.s32.totalorder %s20, 1
    %p190 = por %p188, %p189
    %p192 = scmp.ne.s32.totalorder %s177, %s191
    %p193 = scmp.eq.s32.totalorder %s20, 0
    %p194 = por %p192, %p193
    %s195 = ssub.s32 %s14, %s21
    %p196 = scmp.eq.s32.totalorder %s195, 0
    %s198 = sadd.s32 %s197, 1
    %s199 = scalar_select %p196, %s197, %s198
    %p202 = pneg %p196
    %p203 = scmp.eq.s32.totalorder %s14, 1
    %p204 = por %p202, %p203
    %p205 = scmp.ne.s32.totalorder %s197, %s200
    %p206 = scmp.eq.s32.totalorder %s14, 0
    %p207 = por %p205, %p206
    %p208 = scmp.ne.s32.totalorder %s197, %s200
    %p209 = scmp.eq.s32.totalorder %s19, 1
    %p210 = por %p208, %p209
    %p211 = scmp.ne.s32.totalorder %s200, %s201
    %p212 = scmp.eq.s32.totalorder %s19, 0
    %p213 = por %p211, %p212
    %p214 = scmp.ne.s32.totalorder %s200, %s201
    %p215 = scmp.eq.s32.totalorder %s20, 1
    %p216 = por %p214, %p215
    %p218 = scmp.ne.s32.totalorder %s201, %s217
    %p219 = scmp.eq.s32.totalorder %s20, 0
    %p220 = por %p218, %p219
    %p221 = scmp.le.s32.totalorder 1, %s14
    %p222 = scmp.lt.s32.totalorder %s14, 3
    %p223 = pnand %p221, %p222
    %p224 = pneg %p223
    // Predicated region
    $region9: #{vd_forward.1} parent=5 // pred_check
      _
    $region10: #{vd_forward.1} parent=5 // pred_check_branch
      %226 = sbr.rel (%p223) target = $region12
    $region11: #{vd_forward.1} parent=5 // pred_region
      %s227 = ssub.s32 %s14, 1
      // Predicated region
      $region13: #{vd_forward.1} parent=11 // pred_check
        %p228 = pneg %p61
      $region14: #{vd_forward.1} parent=11 // pred_check_branch
        %230 = sbr.rel (%p228) target = $region16
      $region15: #{vd_forward.1} parent=11 // pred_region
        _
      $region16: #{vd_forward.1} parent=11 // pred_fallthru
        _
      // Predicated region
      $region17: #{vd_forward.1} parent=11 // pred_check
        %p231 = pneg %p82
      $region18: #{vd_forward.1} parent=11 // pred_check_branch
        %233 = sbr.rel (%p231) target = $region20
      $region19: #{vd_forward.1} parent=11 // pred_region
        _
      $region20: #{vd_forward.1} parent=11 // pred_fallthru
        _
      // Predicated region
      $region21: #{vd_forward.1} parent=11 // pred_check
        %p234 = pneg %p103
      $region22: #{vd_forward.1} parent=11 // pred_check_branch
        %236 = sbr.rel (%p234) target = $region24
      $region23: #{vd_forward.1} parent=11 // pred_region
        _
      $region24: #{vd_forward.1} parent=11 // pred_fallthru
        _
      // Predicated region
      $region25: #{vd_forward.1} parent=11 // pred_check
        %p237 = pneg %p124
      $region26: #{vd_forward.1} parent=11 // pred_check_branch
        %239 = sbr.rel (%p237) target = $region28
      $region27: #{vd_forward.1} parent=11 // pred_region
        _
      $region28: #{vd_forward.1} parent=11 // pred_fallthru
        _
      // Predicated region
      $region29: #{vd_forward.1} parent=11 // pred_check
        %p240 = pneg %p145
      $region30: #{vd_forward.1} parent=11 // pred_check_branch
        %242 = sbr.rel (%p240) target = $region32
      $region31: #{vd_forward.1} parent=11 // pred_region
        _
      $region32: #{vd_forward.1} parent=11 // pred_fallthru
        _
      // Predicated region
      $region33: #{vd_forward.1} parent=11 // pred_check
        %p243 = pneg %p166
      $region34: #{vd_forward.1} parent=11 // pred_check_branch
        %245 = sbr.rel (%p243) target = $region36
      $region35: #{vd_forward.1} parent=11 // pred_region
        _
      $region36: #{vd_forward.1} parent=11 // pred_fallthru
        _
      // Predicated region
      $region37: #{vd_forward.1} parent=11 // pred_check
        %p246 = pneg %p187
      $region38: #{vd_forward.1} parent=11 // pred_check_branch
        %248 = sbr.rel (%p246) target = $region40
      $region39: #{vd_forward.1} parent=11 // pred_region
        _
      $region40: #{vd_forward.1} parent=11 // pred_fallthru
        _
    $region12: #{vd_forward.1} parent=5 // pred_fallthru
      _
    %p249 = scmp.lt.s32.totalorder %s14, 2
    // Predicated region
    $region41: #{vd_forward.1} parent=5 // pred_check
      %p250 = pneg %p249
    $region42: #{vd_forward.1} parent=5 // pred_check_branch
      %252 = sbr.rel (%p250) target = $region44
    $region43: #{vd_forward.1} parent=5 // pred_region
      // Predicated region
      $region45: #{vd_forward.1} parent=43 // pred_check
        %p253 = pneg %p34
      $region46: #{vd_forward.1} parent=43 // pred_check_branch
        %255 = sbr.rel (%p253) target = $region48
      $region47: #{vd_forward.1} parent=43 // pred_region
        %p256 = scmp.lt.s32.totalorder %s14, 1
        %s257 = scalar_select %p256, %s14, 1
        %s258 = smul.addr %s257, 2
        %s259 = smul.addr %s258, 4
        %s260 = scalar_lea.vmem %s0, %s259
      $region48: #{vd_forward.1} parent=43 // pred_fallthru
        _
    $region44: #{vd_forward.1} parent=5 // pred_fallthru
      _
    %p261 = scmp.le.s32.totalorder 1, %s14
    %p262 = scmp.lt.s32.totalorder %s14, 3
    %p263 = pnand %p261, %p262
    %p264 = pneg %p263
    // Predicated region
    $region49: #{vd_forward.1} parent=5 // pred_check
      _
    $region50: #{vd_forward.1} parent=5 // pred_check_branch
      %266 = sbr.rel (%p263) target = $region52
    $region51: #{vd_forward.1} parent=5 // pred_region
      %s267 = ssub.s32 %s14, 1
      %p268 = scmp.lt.s32.totalorder %s19, 1
      %s269 = scalar_select %p268, %s19, 1
      %s270 = smul.addr %s269, 2
      %s271 = smul.addr %s270, 4
      %s272 = scalar_lea.vmem %s0, %s271
      %p273 = pneg %p40
      %p274 = pneg %p37
      %p275 = pneg %p61
      %p276 = pneg %p58
      %p277 = pneg %p82
      %p278 = pneg %p79
      %p279 = pneg %p103
      %p280 = pneg %p100
      %p281 = pneg %p124
      %p282 = pneg %p121
      %p283 = pneg %p145
      %p284 = pneg %p142
      %p285 = pneg %p166
      %p286 = pneg %p163
      %p287 = pneg %p187
      %p288 = pneg %p184
      %p289 = pneg %p213
      %p290 = pneg %p210
      %p291 = scmp.lt.s32.totalorder %s19, 1
      %s292 = scalar_select %p291, %s19, 1
      %s293 = smul.addr %s292, 2
      %s294 = smul.addr %s293, 4
      %s295 = scalar_lea.vmem %s8, %s294
      %p296 = scmp.lt.s32.totalorder %s19, 1
      %s297 = scalar_select %p296, %s19, 1
      %s298 = smul.addr %s297, 2
      %s299 = smul.addr %s298, 4
      %s300 = scalar_lea.vmem %s0, %s299
      %p301 = scmp.lt.s32.totalorder %s19, 1
      %s302 = scalar_select %p301, %s19, 1
      %s303 = smul.addr %s302, 2
      %s304 = smul.addr %s303, 4
      %s305 = scalar_lea.vmem %s8, %s304
      %v306 = vld [vmem:[%s1] ss:$2 sm:$0x3]
      %s307 = scalar_lea.vmem %s1, 1
      %v308 = vld [vmem:[%s307] ss:$2 sm:$0x3]
      %v309 = vld [vmem:[%s300] sm:$0xff]
      %v310 = vld [vmem:[%s2] sm:$0xff]
      %v311 = vld [vmem:[%s3] sm:$0xff]
      %313 = vset.pattern.permute.xlu0 0
      %314 = vperm.xlu0 %313, %v311
      %v315 = vpop.permute.xlu0 %314
      %318 = vst [vmem:[#allocation1] ss:$2 sm:$0xff] %v309
      %v319 = vld.sshfl [vmem:[#allocation1] sm:$0xff pattern:$0x75316420]
      %v320 = vld.sshfl [vmem:[#allocation1 + $0x8] sm:$0xff pattern:$0x75316420]
      %vm321 = vcmask 31744
      %v323 = vsel %vm321, %v310, 0
      %vm325 = vcmask 1043456
      %v326 = vsel %vm325, %v319, 0
      %v328 = vsel %vm325, %v320, 0
      %330 = vmatpush.msra.mxu0 0.0
      %331 = vmatpush.msra.mxu0 0.0
      %332 = vmatpush.msra.mxu0 0.0
      %333 = vmatpush.msra.mxu0 0.0
      %334 = vmatpush.msra.mxu0 0.0
      %335 = vmatpush.msra.mxu0 0.0
      %336 = vmatpush.msra.mxu0 0.0
      %337 = vmatpush.msra.mxu0 0.0
      %338 = vmatpush.msra.mxu0 0.0
      %339 = vmatpush.msra.mxu0 0.0
      %340 = vmatpush.msra.mxu0 0.0
      %341 = vmatpush.msra.mxu0 0.0
      %342 = vmatpush.msra.mxu0 0.0
      %343 = vmatpush.msra.mxu0 0.0
      %344 = vmatpush.msra.mxu0 0.0
      %345 = vmatpush.msra.mxu0 %v326
      %346 = vmatmul.f32.gmra.mxu0 %v323
      %v347 = vpop.f32.mrf.mxu0
      %v348 = vadd.f32 %v315, %v347
      %349 = vdwg.mxu0
      %350 = vmatpush.msra.mxu0 0.0
      %351 = vmatpush.msra.mxu0 0.0
      %352 = vmatpush.msra.mxu0 0.0
      %353 = vmatpush.msra.mxu0 0.0
      %354 = vmatpush.msra.mxu0 0.0
      %355 = vmatpush.msra.mxu0 0.0
      %356 = vmatpush.msra.mxu0 0.0
      %357 = vmatpush.msra.mxu0 0.0
      %358 = vmatpush.msra.mxu0 0.0
      %359 = vmatpush.msra.mxu0 0.0
      %360 = vmatpush.msra.mxu0 0.0
      %361 = vmatpush.msra.mxu0 0.0
      %362 = vmatpush.msra.mxu0 0.0
      %363 = vmatpush.msra.mxu0 0.0
      %364 = vmatpush.msra.mxu0 0.0
      %365 = vmatpush.msra.mxu0 %v328
      %366 = vmatmul.f32.gmra.mxu0 %v323
      %v367 = vpop.f32.mrf.mxu0
      %v368 = vadd.f32 %v315, %v367
      %369 = vdwg.mxu0
      %370 = vst [vmem:[#allocation2] sm:$0xff] 0.0
      %371 = vst [vmem:[#allocation2 + $0x18] sm:$0xff] 0.0
      %372 = vst [vmem:[#allocation2 + $0x8] sm:$0xff] %v348
      %373 = vst [vmem:[#allocation2 + $0x10] sm:$0xff] %v368
      %v374 = vld [vmem:[#allocation2] sm:$0xff]
      %v375 = vld [vmem:[#allocation2 + $0x8] sm:$0xff]
      %v376 = vld [vmem:[#allocation2 + $0x10] sm:$0xff]
      %v378 = vperm.slane %v306, 0
      %v379 = vperm.slane %v306, 1
      %380 = vrot.lane.b32.xlu0 %v378, 111
      %v381 = vpop.permute.xlu0 %380
      %382 = vrot.lane.b32.xlu0 %v379, 111
      %v383 = vpop.permute.xlu0 %382
      %vm384 = vcmask 908288
      %v385 = vsel %vm384, %v381, %v383
      %v389 = vmul.f32 %v374, %v381
      %v390 = vmul.f32 %v375, %v385
      %v391 = vmul.f32 %v376, %v383
      %395 = vrot.lane.b32.xlu0 %v389, 17
      %v396 = vpop.permute.xlu0 %395
      %397 = vrot.lane.b32.xlu0 %v390, 17
      %v398 = vpop.permute.xlu0 %397
      %399 = vrot.lane.b32.xlu0 %v391, 17
      %v400 = vpop.permute.xlu0 %399
      %vm401 = vcmask 138240
      %v402 = vsel %vm401, %v396, %v398
      %v403 = vsel %vm401, %v398, %v400
      %406 = vst [vmem:[#allocation4] sm:$0xff] %v402
      %407 = vst [vmem:[#allocation4 + $0x8] sm:$0xff] %v403
      %v408 = vld [vmem:[#allocation2] sm:$0xff]
      %v409 = vld [vmem:[#allocation2 + $0x8] sm:$0xff]
      %v410 = vld [vmem:[#allocation2 + $0x10] sm:$0xff]
      %414 = vrot.lane.b32.xlu0 %v408, 16
      %v415 = vpop.permute.xlu0 %414
      %416 = vrot.lane.b32.xlu0 %v409, 16
      %v417 = vpop.permute.xlu0 %416
      %418 = vrot.lane.b32.xlu0 %v410, 16
      %v419 = vpop.permute.xlu0 %418
      %vm420 = vcmask 130048
      %v421 = vsel %vm420, %v415, %v417
      %v422 = vsel %vm420, %v417, %v419
      %425 = vst [vmem:[#allocation4 + $0x10] sm:$0xff] %v421
      %426 = vst [vmem:[#allocation4 + $0x18] sm:$0xff] %v422
      %v427 = vld [vmem:[#allocation2] sm:$0xff]
      %v428 = vld [vmem:[#allocation2 + $0x8] sm:$0xff]
      %v429 = vld [vmem:[#allocation2 + $0x10] sm:$0xff]
      %v431 = vperm.slane %v308, 0
      %v432 = vperm.slane %v308, 1
      %433 = vrot.lane.b32.xlu0 %v431, 113
      %v434 = vpop.permute.xlu0 %433
      %435 = vrot.lane.b32.xlu0 %v432, 113
      %v436 = vpop.permute.xlu0 %435
      %vm437 = vcmask 924672
      %v438 = vsel %vm437, %v434, %v436
      %v442 = vmul.f32 %v427, %v434
      %v443 = vmul.f32 %v428, %v438
      %v444 = vmul.f32 %v429, %v436
      %448 = vrot.lane.b32.xlu0 %v442, 15
      %v449 = vpop.permute.xlu0 %448
      %450 = vrot.lane.b32.xlu0 %v443, 15
      %v451 = vpop.permute.xlu0 %450
      %452 = vrot.lane.b32.xlu0 %v444, 15
      %v453 = vpop.permute.xlu0 %452
      %vm454 = vcmask 121856
      %v455 = vsel %vm454, %v449, %v451
      %v456 = vsel %vm454, %v451, %v453
      %459 = vst [vmem:[#allocation4 + $0x20] sm:$0xff] %v455
      %460 = vst [vmem:[#allocation4 + $0x28] sm:$0xff] %v456
      %v461 = vld [vmem:[#allocation2] sm:$0xff]
      %v462 = vld [vmem:[#allocation2 + $0x8] sm:$0xff]
      %v463 = vld [vmem:[#allocation2 + $0x10] sm:$0xff]
      %464 = vrot.lane.b32.xlu0 %v378, 127
      %v465 = vpop.permute.xlu0 %464
      %466 = vrot.lane.b32.xlu0 %v379, 127
      %v467 = vpop.permute.xlu0 %466
      %vm468 = vcmask 1039360
      %v469 = vsel %vm468, %v465, %v467
      %v473 = vmul.f32 %v461, %v465
      %v474 = vmul.f32 %v462, %v469
      %v475 = vmul.f32 %v463, %v467
      %479 = vrot.lane.b32.xlu0 %v473, 1
      %v480 = vpop.permute.xlu0 %479
      %481 = vrot.lane.b32.xlu0 %v474, 1
      %v482 = vpop.permute.xlu0 %481
      %483 = vrot.lane.b32.xlu0 %v475, 1
      %v484 = vpop.permute.xlu0 %483
      %vm485 = vcmask 7168
      %v486 = vsel %vm485, %v480, %v482
      %v487 = vsel %vm485, %v482, %v484
      %490 = vst [vmem:[#allocation4 + $0x30] sm:$0xff] %v486
      %491 = vst [vmem:[#allocation4 + $0x38] sm:$0xff] %v487
      %v492 = vld [vmem:[#allocation2 + $0x8] sm:$0xff]
      %v493 = vld [vmem:[#allocation2 + $0x10] sm:$0xff]
      %494 = vst [vmem:[#allocation4 + $0x40] sm:$0xff] %v492
      %495 = vst [vmem:[#allocation4 + $0x48] sm:$0xff] %v493
      %v496 = vld [vmem:[#allocation2 + $0x8] sm:$0xff]
      %v497 = vld [vmem:[#allocation2 + $0x10] sm:$0xff]
      %v498 = vld [vmem:[#allocation2 + $0x18] sm:$0xff]
      %499 = vrot.lane.b32.xlu0 %v431, 1
      %v500 = vpop.permute.xlu0 %499
      %501 = vrot.lane.b32.xlu0 %v432, 1
      %v502 = vpop.permute.xlu0 %501
      %v503 = vsel %vm485, %v500, %v502
      %v507 = vmul.f32 %v496, %v500
      %v508 = vmul.f32 %v497, %v503
      %v509 = vmul.f32 %v498, %v502
      %513 = vrot.lane.b32.xlu0 %v507, 127
      %v514 = vpop.permute.xlu0 %513
      %515 = vrot.lane.b32.xlu0 %v508, 127
      %v516 = vpop.permute.xlu0 %515
      %517 = vrot.lane.b32.xlu0 %v509, 127
      %v518 = vpop.permute.xlu0 %517
      %v519 = vsel %vm468, %v514, %v516
      %v520 = vsel %vm468, %v516, %v518
      %523 = vst [vmem:[#allocation4 + $0x50] sm:$0xff] %v519
      %524 = vst [vmem:[#allocation4 + $0x58] sm:$0xff] %v520
      %v525 = vld [vmem:[#allocation2 + $0x8] sm:$0xff]
      %v526 = vld [vmem:[#allocation2 + $0x10] sm:$0xff]
      %v527 = vld [vmem:[#allocation2 + $0x18] sm:$0xff]
      %528 = vrot.lane.b32.xlu0 %v378, 15
      %v529 = vpop.permute.xlu0 %528
      %530 = vrot.lane.b32.xlu0 %v379, 15
      %v531 = vpop.permute.xlu0 %530
      %v532 = vsel %vm454, %v529, %v531
      %v536 = vmul.f32 %v525, %v529
      %v537 = vmul.f32 %v526, %v532
      %v538 = vmul.f32 %v527, %v531
      %542 = vrot.lane.b32.xlu0 %v536, 113
      %v543 = vpop.permute.xlu0 %542
      %544 = vrot.lane.b32.xlu0 %v537, 113
      %v545 = vpop.permute.xlu0 %544
      %546 = vrot.lane.b32.xlu0 %v538, 113
      %v547 = vpop.permute.xlu0 %546
      %v548 = vsel %vm437, %v543, %v545
      %v549 = vsel %vm437, %v545, %v547
      %552 = vst [vmem:[#allocation4 + $0x60] sm:$0xff] %v548
      %553 = vst [vmem:[#allocation4 + $0x68] sm:$0xff] %v549
      %v554 = vld [vmem:[#allocation2 + $0x8] sm:$0xff]
      %v555 = vld [vmem:[#allocation2 + $0x10] sm:$0xff]
      %v556 = vld [vmem:[#allocation2 + $0x18] sm:$0xff]
      %560 = vrot.lane.b32.xlu0 %v554, 112
      %v561 = vpop.permute.xlu0 %560
      %562 = vrot.lane.b32.xlu0 %v555, 112
      %v563 = vpop.permute.xlu0 %562
      %564 = vrot.lane.b32.xlu0 %v556, 112
      %v565 = vpop.permute.xlu0 %564
      %vm566 = vcmask 916480
      %v567 = vsel %vm566, %v561, %v563
      %v568 = vsel %vm566, %v563, %v565
      %571 = vst [vmem:[#allocation4 + $0x70] sm:$0xff] %v567
      %572 = vst [vmem:[#allocation4 + $0x78] sm:$0xff] %v568
      %v573 = vld [vmem:[#allocation2 + $0x8] sm:$0xff]
      %v574 = vld [vmem:[#allocation2 + $0x10] sm:$0xff]
      %v575 = vld [vmem:[#allocation2 + $0x18] sm:$0xff]
      %576 = vrot.lane.b32.xlu0 %v431, 17
      %v577 = vpop.permute.xlu0 %576
      %578 = vrot.lane.b32.xlu0 %v432, 17
      %v579 = vpop.permute.xlu0 %578
      %v580 = vsel %vm401, %v577, %v579
      %v584 = vmul.f32 %v573, %v577
      %v585 = vmul.f32 %v574, %v580
      %v586 = vmul.f32 %v575, %v579
      %590 = vrot.lane.b32.xlu0 %v584, 111
      %v591 = vpop.permute.xlu0 %590
      %592 = vrot.lane.b32.xlu0 %v585, 111
      %v593 = vpop.permute.xlu0 %592
      %594 = vrot.lane.b32.xlu0 %v586, 111
      %v595 = vpop.permute.xlu0 %594
      %v596 = vsel %vm384, %v591, %v593
      %v597 = vsel %vm384, %v593, %v595
      %600 = vst [vmem:[#allocation4 + $0x80] sm:$0xff] %v596
      %601 = vst [vmem:[#allocation4 + $0x88] sm:$0xff] %v597
      %v602 = vld [vmem:[%s4] sm:$0xff]
      %v603 = vld [vmem:[%s4 + $0x8] sm:$0xff]
      %v604 = vld [vmem:[%s4 + $0x10] sm:$0xff]
      %v605 = vld [vmem:[%s4 + $0x18] sm:$0xff]
      %v606 = vld [vmem:[#allocation4] sm:$0xff]
      %v607 = vld [vmem:[#allocation4 + $0x8] sm:$0xff]
      %v608 = vld [vmem:[#allocation4 + $0x10] sm:$0xff]
      %v609 = vld [vmem:[#allocation4 + $0x18] sm:$0xff]
      %v610 = vld [vmem:[#allocation4 + $0x20] sm:$0xff]
      %v611 = vld [vmem:[#allocation4 + $0x28] sm:$0xff]
      %v612 = vld [vmem:[#allocation4 + $0x30] sm:$0xff]
      %v613 = vld [vmem:[#allocation4 + $0x38] sm:$0xff]
      %v614 = vld [vmem:[#allocation4 + $0x40] sm:$0xff]
      %v615 = vld [vmem:[#allocation4 + $0x48] sm:$0xff]
      %v616 = vld [vmem:[#allocation4 + $0x50] sm:$0xff]
      %v617 = vld [vmem:[#allocation4 + $0x58] sm:$0xff]
      %v618 = vld [vmem:[#allocation4 + $0x60] sm:$0xff]
      %v619 = vld [vmem:[#allocation4 + $0x68] sm:$0xff]
      %v620 = vld [vmem:[#allocation4 + $0x70] sm:$0xff]
      %v621 = vld [vmem:[#allocation4 + $0x78] sm:$0xff]
      %v622 = vld [vmem:[#allocation4 + $0x80] sm:$0xff]
      %v623 = vld [vmem:[#allocation4 + $0x88] sm:$0xff]
      %v624 = vld [vmem:[%s5] sm:$0xff]
      %v625 = vld [vmem:[%s5 + $0x8] sm:$0xff]
      %v626 = vld [vmem:[%s5 + $0x10] sm:$0xff]
      %v627 = vld [vmem:[%s5 + $0x18] sm:$0xff]
      %629 = vset.pattern.permute.xlu0 0
      %630 = vperm.xlu0 %629, %v624
      %v631 = vpop.permute.xlu0 %630
      %634 = vset.pattern.permute.xlu0 0
      %635 = vperm.xlu0 %634, %v625
      %v636 = vpop.permute.xlu0 %635
      %639 = vset.pattern.permute.xlu0 0
      %640 = vperm.xlu0 %639, %v626
      %v641 = vpop.permute.xlu0 %640
      %644 = vset.pattern.permute.xlu0 0
      %645 = vperm.xlu0 %644, %v627
      %v646 = vpop.permute.xlu0 %645
      %vm648 = vcmask 588800
      %v650 = vsel %vm648, %v602, 0
      %v653 = vsel %vm648, %v603, 0
      %v656 = vsel %vm648, %v604, 0
      %v659 = vsel %vm648, %v605, 0
      %661 = vmatpush.msra.mxu0 0.0
      %662 = vmatpush.msra.mxu0 0.0
      %663 = vmatpush.msra.mxu0 0.0
      %664 = vmatpush.msra.mxu0 0.0
      %665 = vmatpush.msra.mxu0 0.0
      %666 = vmatpush.msra.mxu0 0.0
      %667 = vmatpush.msra.mxu0 0.0
      %668 = vmatpush.msra.mxu0 %v622
      %669 = vmatpush.msra.mxu0 %v620
      %670 = vmatpush.msra.mxu0 %v618
      %671 = vmatpush.msra.mxu0 %v616
      %672 = vmatpush.msra.mxu0 %v614
      %673 = vmatpush.msra.mxu0 %v612
      %674 = vmatpush.msra.mxu0 %v610
      %675 = vmatpush.msra.mxu0 %v608
      %676 = vmatpush.msra.mxu0 %v606
      %677 = vmatmul.f32.gmra.mxu0 %v650
      %v678 = vpop.f32.mrf.mxu0
      %v679 = vadd.f32 %v631, %v678
      %680 = vmatmul.f32.gmra.mxu0 %v653
      %v681 = vpop.f32.mrf.mxu0
      %v682 = vadd.f32 %v636, %v681
      %683 = vmatmul.f32.gmra.mxu0 %v656
      %v684 = vpop.f32.mrf.mxu0
      %v685 = vadd.f32 %v641, %v684
      %686 = vmatmul.f32.gmra.mxu0 %v659
      %v687 = vpop.f32.mrf.mxu0
      %v688 = vadd.f32 %v646, %v687
      %689 = vdwg.mxu0
      %690 = vmatpush.msra.mxu0 0.0
      %691 = vmatpush.msra.mxu0 0.0
      %692 = vmatpush.msra.mxu0 0.0
      %693 = vmatpush.msra.mxu0 0.0
      %694 = vmatpush.msra.mxu0 0.0
      %695 = vmatpush.msra.mxu0 0.0
      %696 = vmatpush.msra.mxu0 0.0
      %697 = vmatpush.msra.mxu0 %v623
      %698 = vmatpush.msra.mxu0 %v621
      %699 = vmatpush.msra.mxu0 %v619
      %700 = vmatpush.msra.mxu0 %v617
      %701 = vmatpush.msra.mxu0 %v615
      %702 = vmatpush.msra.mxu0 %v613
      %703 = vmatpush.msra.mxu0 %v611
      %704 = vmatpush.msra.mxu0 %v609
      %705 = vmatpush.msra.mxu0 %v607
      %706 = vmatmul.f32.gmra.mxu0 %v650
      %v707 = vpop.f32.mrf.mxu0
      %v708 = vadd.f32 %v631, %v707
      %709 = vmatmul.f32.gmra.mxu0 %v653
      %v710 = vpop.f32.mrf.mxu0
      %v711 = vadd.f32 %v636, %v710
      %712 = vmatmul.f32.gmra.mxu0 %v656
      %v713 = vpop.f32.mrf.mxu0
      %v714 = vadd.f32 %v641, %v713
      %715 = vmatmul.f32.gmra.mxu0 %v659
      %v716 = vpop.f32.mrf.mxu0
      %v717 = vadd.f32 %v646, %v716
      %718 = vdwg.mxu0
      %v719 = vxor.u32 %v679, 2147483648
      %v720 = vxor.u32 %v708, 2147483648
      %v721 = vxor.u32 %v682, 2147483648
      %v722 = vxor.u32 %v711, 2147483648
      %v723 = vxor.u32 %v685, 2147483648
      %v724 = vxor.u32 %v714, 2147483648
      %v725 = vxor.u32 %v688, 2147483648
      %v726 = vxor.u32 %v717, 2147483648
      %v727 = vmul.f32 %v719, 1.442695
      %v728 = vpow.pop %v727
      %v729 = vmul.f32 %v720, 1.442695
      %v730 = vpow.pop %v729
      %v731 = vmul.f32 %v721, 1.442695
      %v732 = vpow.pop %v731
      %v733 = vmul.f32 %v722, 1.442695
      %v734 = vpow.pop %v733
      %v735 = vmul.f32 %v723, 1.442695
      %v736 = vpow.pop %v735
      %v737 = vmul.f32 %v724, 1.442695
      %v738 = vpow.pop %v737
      %v739 = vmul.f32 %v725, 1.442695
      %v740 = vpow.pop %v739
      %v741 = vmul.f32 %v726, 1.442695
      %v742 = vpow.pop %v741
      %v743 = vadd.f32 %v728, 1.0
      %v744 = vadd.f32 %v730, 1.0
      %v745 = vadd.f32 %v732, 1.0
      %v746 = vadd.f32 %v734, 1.0
      %v747 = vadd.f32 %v736, 1.0
      %v748 = vadd.f32 %v738, 1.0
      %v749 = vadd.f32 %v740, 1.0
      %v750 = vadd.f32 %v742, 1.0
      %v751 = vrcp.pop %v743
      %v752 = vmul.f32 %v743, %v751
      %v753 = vsub.f32 1.0, %v752
      %v754 = vmul.f32 %v751, %v753
      %v755 = vadd.f32 %v751, %v754
      %vm756 = vweird.f32 %v743
      %vm757 = vweird.f32 %v751
      %vm758 = vmor %vm756, %vm757
      %v759 = vsel %vm758, %v751, %v755
      %v760 = vand.u32 2147483647, %v743
      %vm761 = vcmp.eq.f32.partialorder %v760, 8.507059e+37
      %v762 = vand.u32 %v743, 2147483648
      %v763 = vor.u32 1.1754944e-38, %v762
      %v764 = vsel %vm761, %v763, %v759
      %v765 = vmul.f32 1.0, %v764
      %v766 = vrcp.pop %v744
      %v767 = vmul.f32 %v744, %v766
      %v768 = vsub.f32 1.0, %v767
      %v769 = vmul.f32 %v766, %v768
      %v770 = vadd.f32 %v766, %v769
      %vm771 = vweird.f32 %v744
      %vm772 = vweird.f32 %v766
      %vm773 = vmor %vm771, %vm772
      %v774 = vsel %vm773, %v766, %v770
      %v775 = vand.u32 2147483647, %v744
      %vm776 = vcmp.eq.f32.partialorder %v775, 8.507059e+37
      %v777 = vand.u32 %v744, 2147483648
      %v778 = vor.u32 1.1754944e-38, %v777
      %v779 = vsel %vm776, %v778, %v774
      %v780 = vmul.f32 1.0, %v779
      %v781 = vrcp.pop %v745
      %v782 = vmul.f32 %v745, %v781
      %v783 = vsub.f32 1.0, %v782
      %v784 = vmul.f32 %v781, %v783
      %v785 = vadd.f32 %v781, %v784
      %vm786 = vweird.f32 %v745
      %vm787 = vweird.f32 %v781
      %vm788 = vmor %vm786, %vm787
      %v789 = vsel %vm788, %v781, %v785
      %v790 = vand.u32 2147483647, %v745
      %vm791 = vcmp.eq.f32.partialorder %v790, 8.507059e+37
      %v792 = vand.u32 %v745, 2147483648
      %v793 = vor.u32 1.1754944e-38, %v792
      %v794 = vsel %vm791, %v793, %v789
      %v795 = vmul.f32 1.0, %v794
      %v796 = vrcp.pop %v746
      %v797 = vmul.f32 %v746, %v796
      %v798 = vsub.f32 1.0, %v797
      %v799 = vmul.f32 %v796, %v798
      %v800 = vadd.f32 %v796, %v799
      %vm801 = vweird.f32 %v746
      %vm802 = vweird.f32 %v796
      %vm803 = vmor %vm801, %vm802
      %v804 = vsel %vm803, %v796, %v800
      %v805 = vand.u32 2147483647, %v746
      %vm806 = vcmp.eq.f32.partialorder %v805, 8.507059e+37
      %v807 = vand.u32 %v746, 2147483648
      %v808 = vor.u32 1.1754944e-38, %v807
      %v809 = vsel %vm806, %v808, %v804
      %v810 = vmul.f32 1.0, %v809
      %v811 = vrcp.pop %v747
      %v812 = vmul.f32 %v747, %v811
      %v813 = vsub.f32 1.0, %v812
      %v814 = vmul.f32 %v811, %v813
      %v815 = vadd.f32 %v811, %v814
      %vm816 = vweird.f32 %v747
      %vm817 = vweird.f32 %v811
      %vm818 = vmor %vm816, %vm817
      %v819 = vsel %vm818, %v811, %v815
      %v820 = vand.u32 2147483647, %v747
      %vm821 = vcmp.eq.f32.partialorder %v820, 8.507059e+37
      %v822 = vand.u32 %v747, 2147483648
      %v823 = vor.u32 1.1754944e-38, %v822
      %v824 = vsel %vm821, %v823, %v819
      %v825 = vmul.f32 1.0, %v824
      %v826 = vrcp.pop %v748
      %v827 = vmul.f32 %v748, %v826
      %v828 = vsub.f32 1.0, %v827
      %v829 = vmul.f32 %v826, %v828
      %v830 = vadd.f32 %v826, %v829
      %vm831 = vweird.f32 %v748
      %vm832 = vweird.f32 %v826
      %vm833 = vmor %vm831, %vm832
      %v834 = vsel %vm833, %v826, %v830
      %v835 = vand.u32 2147483647, %v748
      %vm836 = vcmp.eq.f32.partialorder %v835, 8.507059e+37
      %v837 = vand.u32 %v748, 2147483648
      %v838 = vor.u32 1.1754944e-38, %v837
      %v839 = vsel %vm836, %v838, %v834
      %v840 = vmul.f32 1.0, %v839
      %v841 = vrcp.pop %v749
      %v842 = vmul.f32 %v749, %v841
      %v843 = vsub.f32 1.0, %v842
      %v844 = vmul.f32 %v841, %v843
      %v845 = vadd.f32 %v841, %v844
      %vm846 = vweird.f32 %v749
      %vm847 = vweird.f32 %v841
      %vm848 = vmor %vm846, %vm847
      %v849 = vsel %vm848, %v841, %v845
      %v850 = vand.u32 2147483647, %v749
      %vm851 = vcmp.eq.f32.partialorder %v850, 8.507059e+37
      %v852 = vand.u32 %v749, 2147483648
      %v853 = vor.u32 1.1754944e-38, %v852
      %v854 = vsel %vm851, %v853, %v849
      %v855 = vmul.f32 1.0, %v854
      %v856 = vrcp.pop %v750
      %v857 = vmul.f32 %v750, %v856
      %v858 = vsub.f32 1.0, %v857
      %v859 = vmul.f32 %v856, %v858
      %v860 = vadd.f32 %v856, %v859
      %vm861 = vweird.f32 %v750
      %vm862 = vweird.f32 %v856
      %vm863 = vmor %vm861, %vm862
      %v864 = vsel %vm863, %v856, %v860
      %v865 = vand.u32 2147483647, %v750
      %vm866 = vcmp.eq.f32.partialorder %v865, 8.507059e+37
      %v867 = vand.u32 %v750, 2147483648
      %v868 = vor.u32 1.1754944e-38, %v867
      %v869 = vsel %vm866, %v868, %v864
      %v870 = vmul.f32 1.0, %v869
      %v871 = vmul.f32 %v679, %v765
      %v872 = vmul.f32 %v708, %v780
      %v873 = vmul.f32 %v682, %v795
      %v874 = vmul.f32 %v711, %v810
      %v875 = vmul.f32 %v685, %v825
      %v876 = vmul.f32 %v714, %v840
      %v877 = vmul.f32 %v688, %v855
      %v878 = vmul.f32 %v717, %v870
      %879 = vst [vmem:[#allocation3] sm:$0xff] 0.0
      %880 = vst [vmem:[#allocation3 + $0x20] sm:$0xff] 0.0
      %881 = vst [vmem:[#allocation3 + $0x40] sm:$0xff] 0.0
      %882 = vst [vmem:[#allocation3 + $0x60] sm:$0xff] 0.0
      %883 = vst [vmem:[#allocation3 + $0x18] sm:$0xff] 0.0
      %884 = vst [vmem:[#allocation3 + $0x38] sm:$0xff] 0.0
      %885 = vst [vmem:[#allocation3 + $0x58] sm:$0xff] 0.0
      %886 = vst [vmem:[#allocation3 + $0x78] sm:$0xff] 0.0
      %887 = vst [vmem:[#allocation3 + $0x8] sm:$0xff] %v871
      %888 = vst [vmem:[#allocation3 + $0x10] sm:$0xff] %v872
      %889 = vst [vmem:[#allocation3 + $0x28] sm:$0xff] %v873
      %890 = vst [vmem:[#allocation3 + $0x30] sm:$0xff] %v874
      %891 = vst [vmem:[#allocation3 + $0x48] sm:$0xff] %v875
      %892 = vst [vmem:[#allocation3 + $0x50] sm:$0xff] %v876
      %893 = vst [vmem:[#allocation3 + $0x68] sm:$0xff] %v877
      %894 = vst [vmem:[#allocation3 + $0x70] sm:$0xff] %v878
      %v895 = vld [vmem:[#allocation3] sm:$0xff]
      %v896 = vld [vmem:[#allocation3 + $0x8] sm:$0xff]
      %v897 = vld [vmem:[#allocation3 + $0x10] sm:$0xff]
      %v898 = vld [vmem:[#allocation3 + $0x20] sm:$0xff]
      %v899 = vld [vmem:[#allocation3 + $0x28] sm:$0xff]
      %v900 = vld [vmem:[#allocation3 + $0x30] sm:$0xff]
      %v901 = vld [vmem:[#allocation3 + $0x40] sm:$0xff]
      %v902 = vld [vmem:[#allocation3 + $0x48] sm:$0xff]
      %v903 = vld [vmem:[#allocation3 + $0x50] sm:$0xff]
      %v904 = vld [vmem:[#allocation3 + $0x60] sm:$0xff]
      %v905 = vld [vmem:[#allocation3 + $0x68] sm:$0xff]
      %v906 = vld [vmem:[#allocation3 + $0x70] sm:$0xff]
      %v907 = vmul.f32 %v895, %v381
      %v908 = vmul.f32 %v896, %v385
      %v909 = vmul.f32 %v897, %v383
      %v910 = vmul.f32 %v898, %v381
      %v911 = vmul.f32 %v899, %v385
      %v912 = vmul.f32 %v900, %v383
      %v913 = vmul.f32 %v901, %v381
      %v914 = vmul.f32 %v902, %v385
      %v915 = vmul.f32 %v903, %v383
      %v916 = vmul.f32 %v904, %v381
      %v917 = vmul.f32 %v905, %v385
      %v918 = vmul.f32 %v906, %v383
      %931 = vrot.lane.b32.xlu0 %v907, 17
      %v932 = vpop.permute.xlu0 %931
      %933 = vrot.lane.b32.xlu0 %v908, 17
      %v934 = vpop.permute.xlu0 %933
      %935 = vrot.lane.b32.xlu0 %v909, 17
      %v936 = vpop.permute.xlu0 %935
      %937 = vrot.lane.b32.xlu0 %v910, 17
      %v938 = vpop.permute.xlu0 %937
      %939 = vrot.lane.b32.xlu0 %v911, 17
      %v940 = vpop.permute.xlu0 %939
      %941 = vrot.lane.b32.xlu0 %v912, 17
      %v942 = vpop.permute.xlu0 %941
      %943 = vrot.lane.b32.xlu0 %v913, 17
      %v944 = vpop.permute.xlu0 %943
      %945 = vrot.lane.b32.xlu0 %v914, 17
      %v946 = vpop.permute.xlu0 %945
      %947 = vrot.lane.b32.xlu0 %v915, 17
      %v948 = vpop.permute.xlu0 %947
      %949 = vrot.lane.b32.xlu0 %v916, 17
      %v950 = vpop.permute.xlu0 %949
      %951 = vrot.lane.b32.xlu0 %v917, 17
      %v952 = vpop.permute.xlu0 %951
      %953 = vrot.lane.b32.xlu0 %v918, 17
      %v954 = vpop.permute.xlu0 %953
      %v955 = vsel %vm401, %v932, %v934
      %v956 = vsel %vm401, %v934, %v936
      %v957 = vsel %vm401, %v938, %v940
      %v958 = vsel %vm401, %v940, %v942
      %v959 = vsel %vm401, %v944, %v946
      %v960 = vsel %vm401, %v946, %v948
      %v961 = vsel %vm401, %v950, %v952
      %v962 = vsel %vm401, %v952, %v954
      %971 = vst [vmem:[#allocation5] sm:$0xff] %v955
      %972 = vst [vmem:[#allocation5 + $0x8] sm:$0xff] %v956
      %973 = vst [vmem:[#allocation5 + $0x10] sm:$0xff] %v957
      %974 = vst [vmem:[#allocation5 + $0x18] sm:$0xff] %v958
      %975 = vst [vmem:[#allocation5 + $0x20] sm:$0xff] %v959
      %976 = vst [vmem:[#allocation5 + $0x28] sm:$0xff] %v960
      %977 = vst [vmem:[#allocation5 + $0x30] sm:$0xff] %v961
      %978 = vst [vmem:[#allocation5 + $0x38] sm:$0xff] %v962
      %v979 = vld [vmem:[#allocation3] sm:$0xff]
      %v980 = vld [vmem:[#allocation3 + $0x8] sm:$0xff]
      %v981 = vld [vmem:[#allocation3 + $0x10] sm:$0xff]
      %v982 = vld [vmem:[#allocation3 + $0x20] sm:$0xff]
      %v983 = vld [vmem:[#allocation3 + $0x28] sm:$0xff]
      %v984 = vld [vmem:[#allocation3 + $0x30] sm:$0xff]
      %v985 = vld [vmem:[#allocation3 + $0x40] sm:$0xff]
      %v986 = vld [vmem:[#allocation3 + $0x48] sm:$0xff]
      %v987 = vld [vmem:[#allocation3 + $0x50] sm:$0xff]
      %v988 = vld [vmem:[#allocation3 + $0x60] sm:$0xff]
      %v989 = vld [vmem:[#allocation3 + $0x68] sm:$0xff]
      %v990 = vld [vmem:[#allocation3 + $0x70] sm:$0xff]
      %1003 = vrot.lane.b32.xlu0 %v979, 16
      %v1004 = vpop.permute.xlu0 %1003
      %1005 = vrot.lane.b32.xlu0 %v980, 16
      %v1006 = vpop.permute.xlu0 %1005
      %1007 = vrot.lane.b32.xlu0 %v981, 16
      %v1008 = vpop.permute.xlu0 %1007
      %1009 = vrot.lane.b32.xlu0 %v982, 16
      %v1010 = vpop.permute.xlu0 %1009
      %1011 = vrot.lane.b32.xlu0 %v983, 16
      %v1012 = vpop.permute.xlu0 %1011
      %1013 = vrot.lane.b32.xlu0 %v984, 16
      %v1014 = vpop.permute.xlu0 %1013
      %1015 = vrot.lane.b32.xlu0 %v985, 16
      %v1016 = vpop.permute.xlu0 %1015
      %1017 = vrot.lane.b32.xlu0 %v986, 16
      %v1018 = vpop.permute.xlu0 %1017
      %1019 = vrot.lane.b32.xlu0 %v987, 16
      %v1020 = vpop.permute.xlu0 %1019
      %1021 = vrot.lane.b32.xlu0 %v988, 16
      %v1022 = vpop.permute.xlu0 %1021
      %1023 = vrot.lane.b32.xlu0 %v989, 16
      %v1024 = vpop.permute.xlu0 %1023
      %1025 = vrot.lane.b32.xlu0 %v990, 16
      %v1026 = vpop.permute.xlu0 %1025
      %v1027 = vsel %vm420, %v1004, %v1006
      %v1028 = vsel %vm420, %v1006, %v1008
      %v1029 = vsel %vm420, %v1010, %v1012
      %v1030 = vsel %vm420, %v1012, %v1014
      %v1031 = vsel %vm420, %v1016, %v1018
      %v1032 = vsel %vm420, %v1018, %v1020
      %v1033 = vsel %vm420, %v1022, %v1024
      %v1034 = vsel %vm420, %v1024, %v1026
      %1043 = vst [vmem:[#allocation5 + $0x40] sm:$0xff] %v1027
      %1044 = vst [vmem:[#allocation5 + $0x48] sm:$0xff] %v1028
      %1045 = vst [vmem:[#allocation5 + $0x50] sm:$0xff] %v1029
      %1046 = vst [vmem:[#allocation5 + $0x58] sm:$0xff] %v1030
      %1047 = vst [vmem:[#allocation5 + $0x60] sm:$0xff] %v1031
      %1048 = vst [vmem:[#allocation5 + $0x68] sm:$0xff] %v1032
      %1049 = vst [vmem:[#allocation5 + $0x70] sm:$0xff] %v1033
      %1050 = vst [vmem:[#allocation5 + $0x78] sm:$0xff] %v1034
      %v1051 = vld [vmem:[#allocation3] sm:$0xff]
      %v1052 = vld [vmem:[#allocation3 + $0x8] sm:$0xff]
      %v1053 = vld [vmem:[#allocation3 + $0x10] sm:$0xff]
      %v1054 = vld [vmem:[#allocation3 + $0x20] sm:$0xff]
      %v1055 = vld [vmem:[#allocation3 + $0x28] sm:$0xff]
      %v1056 = vld [vmem:[#allocation3 + $0x30] sm:$0xff]
      %v1057 = vld [vmem:[#allocation3 + $0x40] sm:$0xff]
      %v1058 = vld [vmem:[#allocation3 + $0x48] sm:$0xff]
      %v1059 = vld [vmem:[#allocation3 + $0x50] sm:$0xff]
      %v1060 = vld [vmem:[#allocation3 + $0x60] sm:$0xff]
      %v1061 = vld [vmem:[#allocation3 + $0x68] sm:$0xff]
      %v1062 = vld [vmem:[#allocation3 + $0x70] sm:$0xff]
      %v1063 = vmul.f32 %v1051, %v434
      %v1064 = vmul.f32 %v1052, %v438
      %v1065 = vmul.f32 %v1053, %v436
      %v1066 = vmul.f32 %v1054, %v434
      %v1067 = vmul.f32 %v1055, %v438
      %v1068 = vmul.f32 %v1056, %v436
      %v1069 = vmul.f32 %v1057, %v434
      %v1070 = vmul.f32 %v1058, %v438
      %v1071 = vmul.f32 %v1059, %v436
      %v1072 = vmul.f32 %v1060, %v434
      %v1073 = vmul.f32 %v1061, %v438
      %v1074 = vmul.f32 %v1062, %v436
      %1087 = vrot.lane.b32.xlu0 %v1063, 15
      %v1088 = vpop.permute.xlu0 %1087
      %1089 = vrot.lane.b32.xlu0 %v1064, 15
      %v1090 = vpop.permute.xlu0 %1089
      %1091 = vrot.lane.b32.xlu0 %v1065, 15
      %v1092 = vpop.permute.xlu0 %1091
      %1093 = vrot.lane.b32.xlu0 %v1066, 15
      %v1094 = vpop.permute.xlu0 %1093
      %1095 = vrot.lane.b32.xlu0 %v1067, 15
      %v1096 = vpop.permute.xlu0 %1095
      %1097 = vrot.lane.b32.xlu0 %v1068, 15
      %v1098 = vpop.permute.xlu0 %1097
      %1099 = vrot.lane.b32.xlu0 %v1069, 15
      %v1100 = vpop.permute.xlu0 %1099
      %1101 = vrot.lane.b32.xlu0 %v1070, 15
      %v1102 = vpop.permute.xlu0 %1101
      %1103 = vrot.lane.b32.xlu0 %v1071, 15
      %v1104 = vpop.permute.xlu0 %1103
      %1105 = vrot.lane.b32.xlu0 %v1072, 15
      %v1106 = vpop.permute.xlu0 %1105
      %1107 = vrot.lane.b32.xlu0 %v1073, 15
      %v1108 = vpop.permute.xlu0 %1107
      %1109 = vrot.lane.b32.xlu0 %v1074, 15
      %v1110 = vpop.permute.xlu0 %1109
      %v1111 = vsel %vm454, %v1088, %v1090
      %v1112 = vsel %vm454, %v1090, %v1092
      %v1113 = vsel %vm454, %v1094, %v1096
      %v1114 = vsel %vm454, %v1096, %v1098
      %v1115 = vsel %vm454, %v1100, %v1102
      %v1116 = vsel %vm454, %v1102, %v1104
      %v1117 = vsel %vm454, %v1106, %v1108
      %v1118 = vsel %vm454, %v1108, %v1110
      %1127 = vst [vmem:[#allocation5 + $0x80] sm:$0xff] %v1111
      %1128 = vst [vmem:[#allocation5 + $0x88] sm:$0xff] %v1112
      %1129 = vst [vmem:[#allocation5 + $0x90] sm:$0xff] %v1113
      %1130 = vst [vmem:[#allocation5 + $0x98] sm:$0xff] %v1114
      %1131 = vst [vmem:[#allocation5 + $0xa0] sm:$0xff] %v1115
      %1132 = vst [vmem:[#allocation5 + $0xa8] sm:$0xff] %v1116
      %1133 = vst [vmem:[#allocation5 + $0xb0] sm:$0xff] %v1117
      %1134 = vst [vmem:[#allocation5 + $0xb8] sm:$0xff] %v1118
      %v1135 = vld [vmem:[#allocation3] sm:$0xff]
      %v1136 = vld [vmem:[#allocation3 + $0x8] sm:$0xff]
      %v1137 = vld [vmem:[#allocation3 + $0x10] sm:$0xff]
      %v1138 = vld [vmem:[#allocation3 + $0x20] sm:$0xff]
      %v1139 = vld [vmem:[#allocation3 + $0x28] sm:$0xff]
      %v1140 = vld [vmem:[#allocation3 + $0x30] sm:$0xff]
      %v1141 = vld [vmem:[#allocation3 + $0x40] sm:$0xff]
      %v1142 = vld [vmem:[#allocation3 + $0x48] sm:$0xff]
      %v1143 = vld [vmem:[#allocation3 + $0x50] sm:$0xff]
      %v1144 = vld [vmem:[#allocation3 + $0x60] sm:$0xff]
      %v1145 = vld [vmem:[#allocation3 + $0x68] sm:$0xff]
      %v1146 = vld [vmem:[#allocation3 + $0x70] sm:$0xff]
      %v1147 = vmul.f32 %v1135, %v465
      %v1148 = vmul.f32 %v1136, %v469
      %v1149 = vmul.f32 %v1137, %v467
      %v1150 = vmul.f32 %v1138, %v465
      %v1151 = vmul.f32 %v1139, %v469
      %v1152 = vmul.f32 %v1140, %v467
      %v1153 = vmul.f32 %v1141, %v465
      %v1154 = vmul.f32 %v1142, %v469
      %v1155 = vmul.f32 %v1143, %v467
      %v1156 = vmul.f32 %v1144, %v465
      %v1157 = vmul.f32 %v1145, %v469
      %v1158 = vmul.f32 %v1146, %v467
      %1171 = vrot.lane.b32.xlu0 %v1147, 1
      %v1172 = vpop.permute.xlu0 %1171
      %1173 = vrot.lane.b32.xlu0 %v1148, 1
      %v1174 = vpop.permute.xlu0 %1173
      %1175 = vrot.lane.b32.xlu0 %v1149, 1
      %v1176 = vpop.permute.xlu0 %1175
      %1177 = vrot.lane.b32.xlu0 %v1150, 1
      %v1178 = vpop.permute.xlu0 %1177
      %1179 = vrot.lane.b32.xlu0 %v1151, 1
      %v1180 = vpop.permute.xlu0 %1179
      %1181 = vrot.lane.b32.xlu0 %v1152, 1
      %v1182 = vpop.permute.xlu0 %1181
      %1183 = vrot.lane.b32.xlu0 %v1153, 1
      %v1184 = vpop.permute.xlu0 %1183
      %1185 = vrot.lane.b32.xlu0 %v1154, 1
      %v1186 = vpop.permute.xlu0 %1185
      %1187 = vrot.lane.b32.xlu0 %v1155, 1
      %v1188 = vpop.permute.xlu0 %1187
      %1189 = vrot.lane.b32.xlu0 %v1156, 1
      %v1190 = vpop.permute.xlu0 %1189
      %1191 = vrot.lane.b32.xlu0 %v1157, 1
      %v1192 = vpop.permute.xlu0 %1191
      %1193 = vrot.lane.b32.xlu0 %v1158, 1
      %v1194 = vpop.permute.xlu0 %1193
      %v1195 = vsel %vm485, %v1172, %v1174
      %v1196 = vsel %vm485, %v1174, %v1176
      %v1197 = vsel %vm485, %v1178, %v1180
      %v1198 = vsel %vm485, %v1180, %v1182
      %v1199 = vsel %vm485, %v1184, %v1186
      %v1200 = vsel %vm485, %v1186, %v1188
      %v1201 = vsel %vm485, %v1190, %v1192
      %v1202 = vsel %vm485, %v1192, %v1194
      %1211 = vst [vmem:[#allocation5 + $0xc0] sm:$0xff] %v1195
      %1212 = vst [vmem:[#allocation5 + $0xc8] sm:$0xff] %v1196
      %1213 = vst [vmem:[#allocation5 + $0xd0] sm:$0xff] %v1197
      %1214 = vst [vmem:[#allocation5 + $0xd8] sm:$0xff] %v1198
      %1215 = vst [vmem:[#allocation5 + $0xe0] sm:$0xff] %v1199
      %1216 = vst [vmem:[#allocation5 + $0xe8] sm:$0xff] %v1200
      %1217 = vst [vmem:[#allocation5 + $0xf0] sm:$0xff] %v1201
      %1218 = vst [vmem:[#allocation5 + $0xf8] sm:$0xff] %v1202
      %v1219 = vld [vmem:[#allocation3 + $0x8] sm:$0xff]
      %v1220 = vld [vmem:[#allocation3 + $0x10] sm:$0xff]
      %v1221 = vld [vmem:[#allocation3 + $0x28] sm:$0xff]
      %v1222 = vld [vmem:[#allocation3 + $0x30] sm:$0xff]
      %v1223 = vld [vmem:[#allocation3 + $0x48] sm:$0xff]
      %v1224 = vld [vmem:[#allocation3 + $0x50] sm:$0xff]
      %v1225 = vld [vmem:[#allocation3 + $0x68] sm:$0xff]
      %v1226 = vld [vmem:[#allocation3 + $0x70] sm:$0xff]
      %1227 = vst [vmem:[#allocation5 + $0x100] sm:$0xff] %v1219
      %1228 = vst [vmem:[#allocation5 + $0x108] sm:$0xff] %v1220
      %1229 = vst [vmem:[#allocation5 + $0x110] sm:$0xff] %v1221
      %1230 = vst [vmem:[#allocation5 + $0x118] sm:$0xff] %v1222
      %1231 = vst [vmem:[#allocation5 + $0x120] sm:$0xff] %v1223
      %1232 = vst [vmem:[#allocation5 + $0x128] sm:$0xff] %v1224
      %1233 = vst [vmem:[#allocation5 + $0x130] sm:$0xff] %v1225
      %1234 = vst [vmem:[#allocation5 + $0x138] sm:$0xff] %v1226
      %v1235 = vld [vmem:[#allocation3 + $0x8] sm:$0xff]
      %v1236 = vld [vmem:[#allocation3 + $0x10] sm:$0xff]
      %v1237 = vld [vmem:[#allocation3 + $0x18] sm:$0xff]
      %v1238 = vld [vmem:[#allocation3 + $0x28] sm:$0xff]
      %v1239 = vld [vmem:[#allocation3 + $0x30] sm:$0xff]
      %v1240 = vld [vmem:[#allocation3 + $0x38] sm:$0xff]
      %v1241 = vld [vmem:[#allocation3 + $0x48] sm:$0xff]
      %v1242 = vld [vmem:[#allocation3 + $0x50] sm:$0xff]
      %v1243 = vld [vmem:[#allocation3 + $0x58] sm:$0xff]
      %v1244 = vld [vmem:[#allocation3 + $0x68] sm:$0xff]
      %v1245 = vld [vmem:[#allocation3 + $0x70] sm:$0xff]
      %v1246 = vld [vmem:[#allocation3 + $0x78] sm:$0xff]
      %v1247 = vmul.f32 %v1235, %v500
      %v1248 = vmul.f32 %v1236, %v503
      %v1249 = vmul.f32 %v1237, %v502
      %v1250 = vmul.f32 %v1238, %v500
      %v1251 = vmul.f32 %v1239, %v503
      %v1252 = vmul.f32 %v1240, %v502
      %v1253 = vmul.f32 %v1241, %v500
      %v1254 = vmul.f32 %v1242, %v503
      %v1255 = vmul.f32 %v1243, %v502
      %v1256 = vmul.f32 %v1244, %v500
      %v1257 = vmul.f32 %v1245, %v503
      %v1258 = vmul.f32 %v1246, %v502
      %1271 = vrot.lane.b32.xlu0 %v1247, 127
      %v1272 = vpop.permute.xlu0 %1271
      %1273 = vrot.lane.b32.xlu0 %v1248, 127
      %v1274 = vpop.permute.xlu0 %1273
      %1275 = vrot.lane.b32.xlu0 %v1249, 127
      %v1276 = vpop.permute.xlu0 %1275
      %1277 = vrot.lane.b32.xlu0 %v1250, 127
      %v1278 = vpop.permute.xlu0 %1277
      %1279 = vrot.lane.b32.xlu0 %v1251, 127
      %v1280 = vpop.permute.xlu0 %1279
      %1281 = vrot.lane.b32.xlu0 %v1252, 127
      %v1282 = vpop.permute.xlu0 %1281
      %1283 = vrot.lane.b32.xlu0 %v1253, 127
      %v1284 = vpop.permute.xlu0 %1283
      %1285 = vrot.lane.b32.xlu0 %v1254, 127
      %v1286 = vpop.permute.xlu0 %1285
      %1287 = vrot.lane.b32.xlu0 %v1255, 127
      %v1288 = vpop.permute.xlu0 %1287
      %1289 = vrot.lane.b32.xlu0 %v1256, 127
      %v1290 = vpop.permute.xlu0 %1289
      %1291 = vrot.lane.b32.xlu0 %v1257, 127
      %v1292 = vpop.permute.xlu0 %1291
      %1293 = vrot.lane.b32.xlu0 %v1258, 127
      %v1294 = vpop.permute.xlu0 %1293
      %v1295 = vsel %vm468, %v1272, %v1274
      %v1296 = vsel %vm468, %v1274, %v1276
      %v1297 = vsel %vm468, %v1278, %v1280
      %v1298 = vsel %vm468, %v1280, %v1282
      %v1299 = vsel %vm468, %v1284, %v1286
      %v1300 = vsel %vm468, %v1286, %v1288
      %v1301 = vsel %vm468, %v1290, %v1292
      %v1302 = vsel %vm468, %v1292, %v1294
      %1311 = vst [vmem:[#allocation5 + $0x140] sm:$0xff] %v1295
      %1312 = vst [vmem:[#allocation5 + $0x148] sm:$0xff] %v1296
      %1313 = vst [vmem:[#allocation5 + $0x150] sm:$0xff] %v1297
      %1314 = vst [vmem:[#allocation5 + $0x158] sm:$0xff] %v1298
      %1315 = vst [vmem:[#allocation5 + $0x160] sm:$0xff] %v1299
      %1316 = vst [vmem:[#allocation5 + $0x168] sm:$0xff] %v1300
      %1317 = vst [vmem:[#allocation5 + $0x170] sm:$0xff] %v1301
      %1318 = vst [vmem:[#allocation5 + $0x178] sm:$0xff] %v1302
      %v1319 = vld [vmem:[#allocation3 + $0x8] sm:$0xff]
      %v1320 = vld [vmem:[#allocation3 + $0x10] sm:$0xff]
      %v1321 = vld [vmem:[#allocation3 + $0x18] sm:$0xff]
      %v1322 = vld [vmem:[#allocation3 + $0x28] sm:$0xff]
      %v1323 = vld [vmem:[#allocation3 + $0x30] sm:$0xff]
      %v1324 = vld [vmem:[#allocation3 + $0x38] sm:$0xff]
      %v1325 = vld [vmem:[#allocation3 + $0x48] sm:$0xff]
      %v1326 = vld [vmem:[#allocation3 + $0x50] sm:$0xff]
      %v1327 = vld [vmem:[#allocation3 + $0x58] sm:$0xff]
      %v1328 = vld [vmem:[#allocation3 + $0x68] sm:$0xff]
      %v1329 = vld [vmem:[#allocation3 + $0x70] sm:$0xff]
      %v1330 = vld [vmem:[#allocation3 + $0x78] sm:$0xff]
      %v1331 = vmul.f32 %v1319, %v529
      %v1332 = vmul.f32 %v1320, %v532
      %v1333 = vmul.f32 %v1321, %v531
      %v1334 = vmul.f32 %v1322, %v529
      %v1335 = vmul.f32 %v1323, %v532
      %v1336 = vmul.f32 %v1324, %v531
      %v1337 = vmul.f32 %v1325, %v529
      %v1338 = vmul.f32 %v1326, %v532
      %v1339 = vmul.f32 %v1327, %v531
      %v1340 = vmul.f32 %v1328, %v529
      %v1341 = vmul.f32 %v1329, %v532
      %v1342 = vmul.f32 %v1330, %v531
      %1355 = vrot.lane.b32.xlu0 %v1331, 113
      %v1356 = vpop.permute.xlu0 %1355
      %1357 = vrot.lane.b32.xlu0 %v1332, 113
      %v1358 = vpop.permute.xlu0 %1357
      %1359 = vrot.lane.b32.xlu0 %v1333, 113
      %v1360 = vpop.permute.xlu0 %1359
      %1361 = vrot.lane.b32.xlu0 %v1334, 113
      %v1362 = vpop.permute.xlu0 %1361
      %1363 = vrot.lane.b32.xlu0 %v1335, 113
      %v1364 = vpop.permute.xlu0 %1363
      %1365 = vrot.lane.b32.xlu0 %v1336, 113
      %v1366 = vpop.permute.xlu0 %1365
      %1367 = vrot.lane.b32.xlu0 %v1337, 113
      %v1368 = vpop.permute.xlu0 %1367
      %1369 = vrot.lane.b32.xlu0 %v1338, 113
      %v1370 = vpop.permute.xlu0 %1369
      %1371 = vrot.lane.b32.xlu0 %v1339, 113
      %v1372 = vpop.permute.xlu0 %1371
      %1373 = vrot.lane.b32.xlu0 %v1340, 113
      %v1374 = vpop.permute.xlu0 %1373
      %1375 = vrot.lane.b32.xlu0 %v1341, 113
      %v1376 = vpop.permute.xlu0 %1375
      %1377 = vrot.lane.b32.xlu0 %v1342, 113
      %v1378 = vpop.permute.xlu0 %1377
      %v1379 = vsel %vm437, %v1356, %v1358
      %v1380 = vsel %vm437, %v1358, %v1360
      %v1381 = vsel %vm437, %v1362, %v1364
      %v1382 = vsel %vm437, %v1364, %v1366
      %v1383 = vsel %vm437, %v1368, %v1370
      %v1384 = vsel %vm437, %v1370, %v1372
      %v1385 = vsel %vm437, %v1374, %v1376
      %v1386 = vsel %vm437, %v1376, %v1378
      %1395 = vst [vmem:[#allocation5 + $0x180] sm:$0xff] %v1379
      %1396 = vst [vmem:[#allocation5 + $0x188] sm:$0xff] %v1380
      %1397 = vst [vmem:[#allocation5 + $0x190] sm:$0xff] %v1381
      %1398 = vst [vmem:[#allocation5 + $0x198] sm:$0xff] %v1382
      %1399 = vst [vmem:[#allocation5 + $0x1a0] sm:$0xff] %v1383
      %1400 = vst [vmem:[#allocation5 + $0x1a8] sm:$0xff] %v1384
      %1401 = vst [vmem:[#allocation5 + $0x1b0] sm:$0xff] %v1385
      %1402 = vst [vmem:[#allocation5 + $0x1b8] sm:$0xff] %v1386
      %v1403 = vld [vmem:[#allocation3 + $0x8] sm:$0xff]
      %v1404 = vld [vmem:[#allocation3 + $0x10] sm:$0xff]
      %v1405 = vld [vmem:[#allocation3 + $0x18] sm:$0xff]
      %v1406 = vld [vmem:[#allocation3 + $0x28] sm:$0xff]
      %v1407 = vld [vmem:[#allocation3 + $0x30] sm:$0xff]
      %v1408 = vld [vmem:[#allocation3 + $0x38] sm:$0xff]
      %v1409 = vld [vmem:[#allocation3 + $0x48] sm:$0xff]
      %v1410 = vld [vmem:[#allocation3 + $0x50] sm:$0xff]
      %v1411 = vld [vmem:[#allocation3 + $0x58] sm:$0xff]
      %v1412 = vld [vmem:[#allocation3 + $0x68] sm:$0xff]
      %v1413 = vld [vmem:[#allocation3 + $0x70] sm:$0xff]
      %v1414 = vld [vmem:[#allocation3 + $0x78] sm:$0xff]
      %1427 = vrot.lane.b32.xlu0 %v1403, 112
      %v1428 = vpop.permute.xlu0 %1427
      %1429 = vrot.lane.b32.xlu0 %v1404, 112
      %v1430 = vpop.permute.xlu0 %1429
      %1431 = vrot.lane.b32.xlu0 %v1405, 112
      %v1432 = vpop.permute.xlu0 %1431
      %1433 = vrot.lane.b32.xlu0 %v1406, 112
      %v1434 = vpop.permute.xlu0 %1433
      %1435 = vrot.lane.b32.xlu0 %v1407, 112
      %v1436 = vpop.permute.xlu0 %1435
      %1437 = vrot.lane.b32.xlu0 %v1408, 112
      %v1438 = vpop.permute.xlu0 %1437
      %1439 = vrot.lane.b32.xlu0 %v1409, 112
      %v1440 = vpop.permute.xlu0 %1439
      %1441 = vrot.lane.b32.xlu0 %v1410, 112
      %v1442 = vpop.permute.xlu0 %1441
      %1443 = vrot.lane.b32.xlu0 %v1411, 112
      %v1444 = vpop.permute.xlu0 %1443
      %1445 = vrot.lane.b32.xlu0 %v1412, 112
      %v1446 = vpop.permute.xlu0 %1445
      %1447 = vrot.lane.b32.xlu0 %v1413, 112
      %v1448 = vpop.permute.xlu0 %1447
      %1449 = vrot.lane.b32.xlu0 %v1414, 112
      %v1450 = vpop.permute.xlu0 %1449
      %v1451 = vsel %vm566, %v1428, %v1430
      %v1452 = vsel %vm566, %v1430, %v1432
      %v1453 = vsel %vm566, %v1434, %v1436
      %v1454 = vsel %vm566, %v1436, %v1438
      %v1455 = vsel %vm566, %v1440, %v1442
      %v1456 = vsel %vm566, %v1442, %v1444
      %v1457 = vsel %vm566, %v1446, %v1448
      %v1458 = vsel %vm566, %v1448, %v1450
      %1467 = vst [vmem:[#allocation5 + $0x1c0] sm:$0xff] %v1451
      %1468 = vst [vmem:[#allocation5 + $0x1c8] sm:$0xff] %v1452
      %1469 = vst [vmem:[#allocation5 + $0x1d0] sm:$0xff] %v1453
      %1470 = vst [vmem:[#allocation5 + $0x1d8] sm:$0xff] %v1454
      %1471 = vst [vmem:[#allocation5 + $0x1e0] sm:$0xff] %v1455
      %1472 = vst [vmem:[#allocation5 + $0x1e8] sm:$0xff] %v1456
      %1473 = vst [vmem:[#allocation5 + $0x1f0] sm:$0xff] %v1457
      %1474 = vst [vmem:[#allocation5 + $0x1f8] sm:$0xff] %v1458
      %v1475 = vld [vmem:[#allocation3 + $0x8] sm:$0xff]
      %v1476 = vld [vmem:[#allocation3 + $0x10] sm:$0xff]
      %v1477 = vld [vmem:[#allocation3 + $0x18] sm:$0xff]
      %v1478 = vld [vmem:[#allocation3 + $0x28] sm:$0xff]
      %v1479 = vld [vmem:[#allocation3 + $0x30] sm:$0xff]
      %v1480 = vld [vmem:[#allocation3 + $0x38] sm:$0xff]
      %v1481 = vld [vmem:[#allocation3 + $0x48] sm:$0xff]
      %v1482 = vld [vmem:[#allocation3 + $0x50] sm:$0xff]
      %v1483 = vld [vmem:[#allocation3 + $0x58] sm:$0xff]
      %v1484 = vld [vmem:[#allocation3 + $0x68] sm:$0xff]
      %v1485 = vld [vmem:[#allocation3 + $0x70] sm:$0xff]
      %v1486 = vld [vmem:[#allocation3 + $0x78] sm:$0xff]
      %v1487 = vmul.f32 %v1475, %v577
      %v1488 = vmul.f32 %v1476, %v580
      %v1489 = vmul.f32 %v1477, %v579
      %v1490 = vmul.f32 %v1478, %v577
      %v1491 = vmul.f32 %v1479, %v580
      %v1492 = vmul.f32 %v1480, %v579
      %v1493 = vmul.f32 %v1481, %v577
      %v1494 = vmul.f32 %v1482, %v580
      %v1495 = vmul.f32 %v1483, %v579
      %v1496 = vmul.f32 %v1484, %v577
      %v1497 = vmul.f32 %v1485, %v580
      %v1498 = vmul.f32 %v1486, %v579
      %1511 = vrot.lane.b32.xlu0 %v1487, 111
      %v1512 = vpop.permute.xlu0 %1511
      %1513 = vrot.lane.b32.xlu0 %v1488, 111
      %v1514 = vpop.permute.xlu0 %1513
      %1515 = vrot.lane.b32.xlu0 %v1489, 111
      %v1516 = vpop.permute.xlu0 %1515
      %1517 = vrot.lane.b32.xlu0 %v1490, 111
      %v1518 = vpop.permute.xlu0 %1517
      %1519 = vrot.lane.b32.xlu0 %v1491, 111
      %v1520 = vpop.permute.xlu0 %1519
      %1521 = vrot.lane.b32.xlu0 %v1492, 111
      %v1522 = vpop.permute.xlu0 %1521
      %1523 = vrot.lane.b32.xlu0 %v1493, 111
      %v1524 = vpop.permute.xlu0 %1523
      %1525 = vrot.lane.b32.xlu0 %v1494, 111
      %v1526 = vpop.permute.xlu0 %1525
      %1527 = vrot.lane.b32.xlu0 %v1495, 111
      %v1528 = vpop.permute.xlu0 %1527
      %1529 = vrot.lane.b32.xlu0 %v1496, 111
      %v1530 = vpop.permute.xlu0 %1529
      %1531 = vrot.lane.b32.xlu0 %v1497, 111
      %v1532 = vpop.permute.xlu0 %1531
      %1533 = vrot.lane.b32.xlu0 %v1498, 111
      %v1534 = vpop.permute.xlu0 %1533
      %v1535 = vsel %vm384, %v1512, %v1514
      %v1536 = vsel %vm384, %v1514, %v1516
      %v1537 = vsel %vm384, %v1518, %v1520
      %v1538 = vsel %vm384, %v1520, %v1522
      %v1539 = vsel %vm384, %v1524, %v1526
      %v1540 = vsel %vm384, %v1526, %v1528
      %v1541 = vsel %vm384, %v1530, %v1532
      %v1542 = vsel %vm384, %v1532, %v1534
      %1551 = vst [vmem:[#allocation5 + $0x200] sm:$0xff] %v1535
      %1552 = vst [vmem:[#allocation5 + $0x208] sm:$0xff] %v1536
      %1553 = vst [vmem:[#allocation5 + $0x210] sm:$0xff] %v1537
      %1554 = vst [vmem:[#allocation5 + $0x218] sm:$0xff] %v1538
      %1555 = vst [vmem:[#allocation5 + $0x220] sm:$0xff] %v1539
      %1556 = vst [vmem:[#allocation5 + $0x228] sm:$0xff] %v1540
      %1557 = vst [vmem:[#allocation5 + $0x230] sm:$0xff] %v1541
      %1558 = vst [vmem:[#allocation5 + $0x238] sm:$0xff] %v1542
      %v1559 = vld [vmem:[%s6] sm:$0x77]
      %v1560 = vld [vmem:[%s6 + $0x8] sm:$0x7]
      %v1561 = vld [vmem:[#allocation5] sm:$0xff]
      %v1562 = vld [vmem:[#allocation5 + $0x8] sm:$0xff]
      %v1563 = vld [vmem:[#allocation5 + $0x10] sm:$0xff]
      %v1564 = vld [vmem:[#allocation5 + $0x18] sm:$0xff]
      %v1565 = vld [vmem:[#allocation5 + $0x20] sm:$0xff]
      %v1566 = vld [vmem:[#allocation5 + $0x28] sm:$0xff]
      %v1567 = vld [vmem:[#allocation5 + $0x30] sm:$0xff]
      %v1568 = vld [vmem:[#allocation5 + $0x38] sm:$0xff]
      %v1569 = vld [vmem:[#allocation5 + $0x40] sm:$0xff]
      %v1570 = vld [vmem:[#allocation5 + $0x48] sm:$0xff]
      %v1571 = vld [vmem:[#allocation5 + $0x50] sm:$0xff]
      %v1572 = vld [vmem:[#allocation5 + $0x58] sm:$0xff]
      %v1573 = vld [vmem:[#allocation5 + $0x60] sm:$0xff]
      %v1574 = vld [vmem:[#allocation5 + $0x68] sm:$0xff]
      %v1575 = vld [vmem:[#allocation5 + $0x70] sm:$0xff]
      %v1576 = vld [vmem:[#allocation5 + $0x78] sm:$0xff]
      %v1577 = vld [vmem:[#allocation5 + $0x80] sm:$0xff]
      %v1578 = vld [vmem:[#allocation5 + $0x88] sm:$0xff]
      %v1579 = vld [vmem:[#allocation5 + $0x90] sm:$0xff]
      %v1580 = vld [vmem:[#allocation5 + $0x98] sm:$0xff]
      %v1581 = vld [vmem:[#allocation5 + $0xa0] sm:$0xff]
      %v1582 = vld [vmem:[#allocation5 + $0xa8] sm:$0xff]
      %v1583 = vld [vmem:[#allocation5 + $0xb0] sm:$0xff]
      %v1584 = vld [vmem:[#allocation5 + $0xb8] sm:$0xff]
      %v1585 = vld [vmem:[#allocation5 + $0xc0] sm:$0xff]
      %v1586 = vld [vmem:[#allocation5 + $0xc8] sm:$0xff]
      %v1587 = vld [vmem:[#allocation5 + $0xd0] sm:$0xff]
      %v1588 = vld [vmem:[#allocation5 + $0xd8] sm:$0xff]
      %v1589 = vld [vmem:[#allocation5 + $0xe0] sm:$0xff]
      %v1590 = vld [vmem:[#allocation5 + $0xe8] sm:$0xff]
      %v1591 = vld [vmem:[#allocation5 + $0xf0] sm:$0xff]
      %v1592 = vld [vmem:[#allocation5 + $0xf8] sm:$0xff]
      %v1593 = vld [vmem:[#allocation5 + $0x100] sm:$0xff]
      %v1594 = vld [vmem:[#allocation5 + $0x108] sm:$0xff]
      %v1595 = vld [vmem:[#allocation5 + $0x110] sm:$0xff]
      %v1596 = vld [vmem:[#allocation5 + $0x118] sm:$0xff]
      %v1597 = vld [vmem:[#allocation5 + $0x120] sm:$0xff]
      %v1598 = vld [vmem:[#allocation5 + $0x128] sm:$0xff]
      %v1599 = vld [vmem:[#allocation5 + $0x130] sm:$0xff]
      %v1600 = vld [vmem:[#allocation5 + $0x138] sm:$0xff]
      %v1601 = vld [vmem:[#allocation5 + $0x140] sm:$0xff]
      %v1602 = vld [vmem:[#allocation5 + $0x148] sm:$0xff]
      %v1603 = vld [vmem:[#allocation5 + $0x150] sm:$0xff]
      %v1604 = vld [vmem:[#allocation5 + $0x158] sm:$0xff]
      %v1605 = vld [vmem:[#allocation5 + $0x160] sm:$0xff]
      %v1606 = vld [vmem:[#allocation5 + $0x168] sm:$0xff]
      %v1607 = vld [vmem:[#allocation5 + $0x170] sm:$0xff]
      %v1608 = vld [vmem:[#allocation5 + $0x178] sm:$0xff]
      %v1609 = vld [vmem:[#allocation5 + $0x180] sm:$0xff]
      %v1610 = vld [vmem:[#allocation5 + $0x188] sm:$0xff]
      %v1611 = vld [vmem:[#allocation5 + $0x190] sm:$0xff]
      %v1612 = vld [vmem:[#allocation5 + $0x198] sm:$0xff]
      %v1613 = vld [vmem:[#allocation5 + $0x1a0] sm:$0xff]
      %v1614 = vld [vmem:[#allocation5 + $0x1a8] sm:$0xff]
      %v1615 = vld [vmem:[#allocation5 + $0x1b0] sm:$0xff]
      %v1616 = vld [vmem:[#allocation5 + $0x1b8] sm:$0xff]
      %v1617 = vld [vmem:[#allocation5 + $0x1c0] sm:$0xff]
      %v1618 = vld [vmem:[#allocation5 + $0x1c8] sm:$0xff]
      %v1619 = vld [vmem:[#allocation5 + $0x1d0] sm:$0xff]
      %v1620 = vld [vmem:[#allocation5 + $0x1d8] sm:$0xff]
      %v1621 = vld [vmem:[#allocation5 + $0x1e0] sm:$0xff]
      %v1622 = vld [vmem:[#allocation5 + $0x1e8] sm:$0xff]
      %v1623 = vld [vmem:[#allocation5 + $0x1f0] sm:$0xff]
      %v1624 = vld [vmem:[#allocation5 + $0x1f8] sm:$0xff]
      %v1625 = vld [vmem:[#allocation5 + $0x200] sm:$0xff]
      %v1626 = vld [vmem:[#allocation5 + $0x208] sm:$0xff]
      %v1627 = vld [vmem:[#allocation5 + $0x210] sm:$0xff]
      %v1628 = vld [vmem:[#allocation5 + $0x218] sm:$0xff]
      %v1629 = vld [vmem:[#allocation5 + $0x220] sm:$0xff]
      %v1630 = vld [vmem:[#allocation5 + $0x228] sm:$0xff]
      %v1631 = vld [vmem:[#allocation5 + $0x230] sm:$0xff]
      %v1632 = vld [vmem:[#allocation5 + $0x238] sm:$0xff]
      %v1633 = vld [vmem:[%s7] sm:$0x7]
      %1635 = vset.pattern.permute.xlu0 0
      %1636 = vperm.xlu0 %1635, %v1633
      %v1637 = vpop.permute.xlu0 %1636
      %1641 = vst [vmem:[#allocation1] ss:$2 sm:$0xff] %v1559
      %s1642 = scalar_lea.vmem [#allocation1], 16
      %1643 = vst [vmem:[%s1642] ss:$2 sm:$0xff] %v1560
      %v1644 = vld.sshfl [vmem:[#allocation1] sm:$0xff pattern:$0x75316420]
      %v1645 = vld.sshfl [vmem:[#allocation1 + $0x8] sm:$0xff pattern:$0x75316420]
      %v1646 = vld.sshfl [vmem:[#allocation1 + $0x10] sm:$0xff pattern:$0x75316420]
      %vm1649 = vcmask 261120
      %v1650 = vsel %vm1649, %v1646, 0
      %1652 = vmatpush.msra.mxu0 %v1591
      %1653 = vmatpush.msra.mxu0 %v1589
      %1654 = vmatpush.msra.mxu0 %v1587
      %1655 = vmatpush.msra.mxu0 %v1585
      %1656 = vmatpush.msra.mxu0 %v1583
      %1657 = vmatpush.msra.mxu0 %v1581
      %1658 = vmatpush.msra.mxu0 %v1579
      %1659 = vmatpush.msra.mxu0 %v1577
      %1660 = vmatpush.msra.mxu0 %v1575
      %1661 = vmatpush.msra.mxu0 %v1573
      %1662 = vmatpush.msra.mxu0 %v1571
      %1663 = vmatpush.msra.mxu0 %v1569
      %1664 = vmatpush.msra.mxu0 %v1567
      %1665 = vmatpush.msra.mxu0 %v1565
      %1666 = vmatpush.msra.mxu0 %v1563
      %1667 = vmatpush.msra.mxu0 %v1561
      %1668 = vmatmul.f32.gmra.mxu0 %v1644
      %v1669 = vpop.f32.mrf.mxu0
      %v1670 = vadd.f32 %v1637, %v1669
      %1671 = vdwg.mxu0
      %1672 = vmatpush.msra.mxu0 %v1623
      %1673 = vmatpush.msra.mxu0 %v1621
      %1674 = vmatpush.msra.mxu0 %v1619
      %1675 = vmatpush.msra.mxu0 %v1617
      %1676 = vmatpush.msra.mxu0 %v1615
      %1677 = vmatpush.msra.mxu0 %v1613
      %1678 = vmatpush.msra.mxu0 %v1611
      %1679 = vmatpush.msra.mxu0 %v1609
      %1680 = vmatpush.msra.mxu0 %v1607
      %1681 = vmatpush.msra.mxu0 %v1605
      %1682 = vmatpush.msra.mxu0 %v1603
      %1683 = vmatpush.msra.mxu0 %v1601
      %1684 = vmatpush.msra.mxu0 %v1599
      %1685 = vmatpush.msra.mxu0 %v1597
      %1686 = vmatpush.msra.mxu0 %v1595
      %1687 = vmatpush.msra.mxu0 %v1593
      %1688 = vmatmul.f32.gmra.mxu0 %v1645
      %v1689 = vpop.f32.mrf.mxu0
      %v1690 = vadd.f32 %v1670, %v1689
      %1691 = vdwg.mxu0
      %1692 = vmatpush.msra.mxu0 0.0
      %1693 = vmatpush.msra.mxu0 0.0
      %1694 = vmatpush.msra.mxu0 0.0
      %1695 = vmatpush.msra.mxu0 0.0
      %1696 = vmatpush.msra.mxu0 0.0
      %1697 = vmatpush.msra.mxu0 0.0
      %1698 = vmatpush.msra.mxu0 0.0
      %1699 = vmatpush.msra.mxu0 0.0
      %1700 = vmatpush.msra.mxu0 0.0
      %1701 = vmatpush.msra.mxu0 0.0
      %1702 = vmatpush.msra.mxu0 0.0
      %1703 = vmatpush.msra.mxu0 0.0
      %1704 = vmatpush.msra.mxu0 %v1631
      %1705 = vmatpush.msra.mxu0 %v1629
      %1706 = vmatpush.msra.mxu0 %v1627
      %1707 = vmatpush.msra.mxu0 %v1625
      %1708 = vmatmul.f32.gmra.mxu0 %v1650
      %v1709 = vpop.f32.mrf.mxu0
      %v1710 = vadd.f32 %v1690, %v1709
      %1711 = vdwg.mxu0
      %1712 = vmatpush.msra.mxu0 %v1592
      %1713 = vmatpush.msra.mxu0 %v1590
      %1714 = vmatpush.msra.mxu0 %v1588
      %1715 = vmatpush.msra.mxu0 %v1586
      %1716 = vmatpush.msra.mxu0 %v1584
      %1717 = vmatpush.msra.mxu0 %v1582
      %1718 = vmatpush.msra.mxu0 %v1580
      %1719 = vmatpush.msra.mxu0 %v1578
      %1720 = vmatpush.msra.mxu0 %v1576
      %1721 = vmatpush.msra.mxu0 %v1574
      %1722 = vmatpush.msra.mxu0 %v1572
      %1723 = vmatpush.msra.mxu0 %v1570
      %1724 = vmatpush.msra.mxu0 %v1568
      %1725 = vmatpush.msra.mxu0 %v1566
      %1726 = vmatpush.msra.mxu0 %v1564
      %1727 = vmatpush.msra.mxu0 %v1562
      %1728 = vmatmul.f32.gmra.mxu0 %v1644
      %v1729 = vpop.f32.mrf.mxu0
      %v1730 = vadd.f32 %v1637, %v1729
      %1731 = vdwg.mxu0
      %1732 = vmatpush.msra.mxu0 %v1624
      %1733 = vmatpush.msra.mxu0 %v1622
      %1734 = vmatpush.msra.mxu0 %v1620
      %1735 = vmatpush.msra.mxu0 %v1618
      %1736 = vmatpush.msra.mxu0 %v1616
      %1737 = vmatpush.msra.mxu0 %v1614
      %1738 = vmatpush.msra.mxu0 %v1612
      %1739 = vmatpush.msra.mxu0 %v1610
      %1740 = vmatpush.msra.mxu0 %v1608
      %1741 = vmatpush.msra.mxu0 %v1606
      %1742 = vmatpush.msra.mxu0 %v1604
      %1743 = vmatpush.msra.mxu0 %v1602
      %1744 = vmatpush.msra.mxu0 %v1600
      %1745 = vmatpush.msra.mxu0 %v1598
      %1746 = vmatpush.msra.mxu0 %v1596
      %1747 = vmatpush.msra.mxu0 %v1594
      %1748 = vmatmul.f32.gmra.mxu0 %v1645
      %v1749 = vpop.f32.mrf.mxu0
      %v1750 = vadd.f32 %v1730, %v1749
      %1751 = vdwg.mxu0
      %1752 = vmatpush.msra.mxu0 0.0
      %1753 = vmatpush.msra.mxu0 0.0
      %1754 = vmatpush.msra.mxu0 0.0
      %1755 = vmatpush.msra.mxu0 0.0
      %1756 = vmatpush.msra.mxu0 0.0
      %1757 = vmatpush.msra.mxu0 0.0
      %1758 = vmatpush.msra.mxu0 0.0
      %1759 = vmatpush.msra.mxu0 0.0
      %1760 = vmatpush.msra.mxu0 0.0
      %1761 = vmatpush.msra.mxu0 0.0
      %1762 = vmatpush.msra.mxu0 0.0
      %1763 = vmatpush.msra.mxu0 0.0
      %1764 = vmatpush.msra.mxu0 %v1632
      %1765 = vmatpush.msra.mxu0 %v1630
      %1766 = vmatpush.msra.mxu0 %v1628
      %1767 = vmatpush.msra.mxu0 %v1626
      %1768 = vmatmul.f32.gmra.mxu0 %v1650
      %v1769 = vpop.f32.mrf.mxu0
      %v1770 = vadd.f32 %v1750, %v1769
      %1771 = vdwg.mxu0
      %v1774 = vrot.slane %v1770, 4
      %v1775 = vsel %vm325, %v1710, %v1774
      %1777 = vst [vmem:[%s305] sm:$0x77] %v1775
      %p1778 = scmp.lt.s32.totalorder %s19, 1
      %s1779 = scalar_select %p1778, %s19, 1
      %s1780 = smul.addr %s1779, 2
      %s1781 = smul.addr %s1780, 4
      %s1782 = scalar_lea.vmem %s8, %s1781
      // Predicated region
      $region53: #{vd_forward.1} parent=51 // pred_check
        %p1783 = pneg %p210
      $region54: #{vd_forward.1} parent=51 // pred_check_branch
        %1785 = sbr.rel (%p1783) target = $region56
      $region55: #{vd_forward.1} parent=51 // pred_region
        _
      $region56: #{vd_forward.1} parent=51 // pred_fallthru
        _
    $region52: #{vd_forward.1} parent=5 // pred_fallthru
      _
    %p1786 = scmp.le.s32.totalorder 2, %s14
    // Predicated region
    $region57: #{vd_forward.1} parent=5 // pred_check
      %p1787 = pneg %p1786
    $region58: #{vd_forward.1} parent=5 // pred_check_branch
      %1789 = sbr.rel (%p1787) target = $region60
    $region59: #{vd_forward.1} parent=5 // pred_region
      %s1790 = ssub.s32 %s14, 2
      // Predicated region
      $region61: #{vd_forward.1} parent=59 // pred_check
        %p1791 = pneg %p216
      $region62: #{vd_forward.1} parent=59 // pred_check_branch
        %1793 = sbr.rel (%p1791) target = $region64
      $region63: #{vd_forward.1} parent=59 // pred_region
        %p1794 = scmp.lt.s32.totalorder %s20, 1
        %s1795 = scalar_select %p1794, %s20, 1
        %s1796 = smul.addr %s1795, 2
        %s1797 = smul.addr %s1796, 4
        %s1798 = scalar_lea.vmem %s8, %s1797
      $region64: #{vd_forward.1} parent=59 // pred_fallthru
        _
    $region60: #{vd_forward.1} parent=5 // pred_fallthru
      _
  $region6: #{vd_forward.1} parent=0 // loop_footer
    %s18 = sadd.s32 1, %s14
  $region7: #{vd_forward.1} parent=0 // loop_footer_branch
    %13 = sbr.rel target = $region3
  $region8: #{vd_forward.1} parent=0 // loop_exit
    _

</llo_original>
